<compile_context>
chip_gen: v5e
topology: v5e:2x2
jax: 0.10.0
libtpu: 0.0.40
codegen_flags: <defaults>
</compile_context>

<pallas_src>
import jax
import jax.numpy as jnp
import numpy as np
from jax.experimental import pallas as pl
from jax.experimental.pallas import tpu as pltpu

# Static problem sizes (small, consistent with the module's forward)
N = 16                    # nodes per graph
F = 32                    # input_dim == output_dim
H = 4                     # GAT heads
C = F // H                # head dim
ED = 8                    # edge feature dim
B = 8                     # graphs in the batch
GRAPHS_PER_STEP = 4       # Bb: 2 grid steps -> both v7x TCs; use B for one M=128 step (v5e)
R = GRAPHS_PER_STEP * N   # rows (nodes) processed per grid step
HN = H * N                # width of the per-head attention slab
EPS = 1e-5
NEG_SLOPE = 0.2


# --------------------------------------------------------------------------- #
# Pallas kernel: GAT_block forward for Bb graphs (one grid step), flat layout
# --------------------------------------------------------------------------- #
def gat_block_kernel(x_ref, ea_ref, adj_ref, w_ref, att_ref, bmat_ref,
                     gsrc_ref, nodemask_ref, gg_ref, gones_ref,
                     colmask_ref, rep_ref, blkmask_ref, gb_ref, o_ref):
    x = x_ref[...]                                                      # (R, F)
    ea = ea_ref[...]                                                    # (R, N*ED)
    adj = adj_ref[...]                                                  # (R, HN)

    # node projection (shared linear for src/dst, bias=False)                -> MXU
    xp = jnp.dot(x, w_ref[...], preferred_element_type=jnp.float32)          # (R, F)

    # fused dst/src attention logits (shared LHS xp): [:, :HN]=dst(head-bcast), [:, HN:]=src
    lg = jnp.dot(xp, att_ref[...], preferred_element_type=jnp.float32)       # (R, HN+H)
    a_dst = lg[:, :HN]                                                       # (R, HN)
    a_src = lg[:, HN:]                                                       # (R, H)

    # edge-attr logits (lin_edge & att_edge folded into one constant operand) -> MXU
    a_edge = jnp.dot(ea, bmat_ref[...], preferred_element_type=jnp.float32)  # (R, HN)

    # scatter src-node logits into the flat slab:  srcslab[r, h*N+j] = a_src[graph(r)*N+j, h]
    # (two constant-operand matmuls + one mask; no transposes / (N,H,N) reshapes)
    msrc = jnp.dot(a_src, gsrc_ref[...], preferred_element_type=jnp.float32) # (R, HN)
    msrc = msrc * nodemask_ref[...]
    srcslab = jnp.dot(gg_ref[...], msrc, preferred_element_type=jnp.float32) # (R, HN)

    # logits + LeakyReLU(0.2) + adjacency mask, all in the flat (R, HN) slab
    alpha = a_dst + a_edge + srcslab
    alpha = jnp.where(alpha > 0, alpha, NEG_SLOPE * alpha)
    alpha = jnp.where(adj > 0, alpha, jnp.float32(-1e30))

    # grouped softmax over incoming edges, per head, without leaving the flat layout.
    # A single per-row max is exact (a per-row constant cancels inside each head's group);
    # relies on every node having >= 1 unmasked in-edge per head (self-loops guarantee it).
    m = jnp.max(alpha, axis=-1, keepdims=True)                               # (R, 1)
    p = jnp.exp(alpha - m) * adj                                             # (R, HN)
    denom = jnp.dot(p, gones_ref[...], preferred_element_type=jnp.float32)   # per-head sum, bcast
    denom = jnp.maximum(denom, jnp.float32(1e-20))
    attn = p * pl.reciprocal(denom, approx=False)                            # exact -> tight numerics
    # TODO(synk): attention dropout skipped (eval mode / drop_prob inactive at inference)

    # aggregation (aggr='sum') + implicit head concat as ONE block-structured matmul.
    # K axis = (graph, head, src) of size Bb*H*N; operands built on MXU/VPU (no sublane tile).
    attn_big = jnp.concatenate([attn] * GRAPHS_PER_STEP, axis=1) * colmask_ref[...]      # (R, Bb*HN)
    xp_big = jnp.dot(rep_ref[...], xp,
                     preferred_element_type=jnp.float32) * blkmask_ref[...]              # (Bb*HN, F)
    gat = jnp.dot(attn_big, xp_big, preferred_element_type=jnp.float32)                  # (R, F)

    # InstanceNorm (affine, biased var over each graph's nodes), kept in the flat layout:
    # per-graph mean/var via the 0/1 graph-indicator matmul (no (Bb,N,F) reshape/reduce).
    inv_n = jnp.float32(1.0 / N)
    mean = jnp.dot(gg_ref[...], gat, preferred_element_type=jnp.float32) * inv_n
    cent = gat - mean
    var = jnp.dot(gg_ref[...], cent * cent, preferred_element_type=jnp.float32) * inv_n
    normed = cent * jax.lax.rsqrt(var + EPS)
    normed = normed * gb_ref[0:1, :] + gb_ref[1:2, :]                        # gamma, beta

    out = x + normed                                                         # residual add
    o_ref[...] = jnp.where(out > 0, out,
                           jnp.exp(jnp.minimum(out, 0.0)) - 1.0)             # ELU(alpha=1)


def gat_block_forward(x_flat, ea_flat, adj_flat, w, att_cat, b_mat,
                      gsrc, nodemask, gg, gones, colmask, rep, blkmask_big, gb):
    total_rows = x_flat.shape[0]
    assert total_rows % R == 0
    n_steps = total_rows // R

    def rowblock(cols):
        return pl.BlockSpec((R, cols), lambda g: (g, 0))

    def shared(shape):
        # same block every step -> fetched once, stays resident in VMEM
        return pl.BlockSpec(shape, lambda g: (0, 0))

    return pl.pallas_call(
        gat_block_kernel,
        out_shape=jax.ShapeDtypeStruct((total_rows, F), jnp.float32),
        grid=(n_steps,),
        in_specs=[
            rowblock(F),                          # x
            rowblock(N * ED),                     # ea
            rowblock(HN),                         # adj (per-head mask slab)
            shared((F, F)),                       # w (GATConv lin)
            shared((F, HN + H)),                  # [adst_hn | asrc] fused logits RHS
            shared((N * ED, HN)),                 # folded edge projection
            shared((H, HN)),                      # gsrc: per-head lane broadcast
            shared((R, HN)),                      # nodemask: [node(r)==src]
            shared((R, R)),                       # GG: graph indicator
            shared((HN, HN)),                     # gones: per-head block-ones (softmax denom)
            shared((R, GRAPHS_PER_STEP * HN)),    # colmask: graph column mask
            shared((GRAPHS_PER_STEP * HN, R)),    # rep: row replication for xp_big
            shared((GRAPHS_PER_STEP * HN, F)),    # block-diag head mask (tiled per graph)
            shared((2, F)),                       # InstanceNorm gamma / beta
        ],
        out_specs=rowblock(F),
        compiler_params=pltpu.CompilerParams(dimension_semantics=("parallel",)),
    )(x_flat, ea_flat, adj_flat, w, att_cat, b_mat,
      gsrc, nodemask, gg, gones, colmask, rep, blkmask_big, gb)


# --------------------------------------------------------------------------- #
# Glue: parameter setup and sparse -> dense graph packing (plain JAX, host-side)
# --------------------------------------------------------------------------- #
def att_to_block(att):
    """(H, C) attention vector -> (F, H) block matrix so that xp @ A = per-head logits."""
    h, c = att.shape
    eye = jnp.eye(h, dtype=att.dtype)
    return (att[:, :, None] * eye[:, None, :]).reshape(h * c, h)


def build_dense_graph(edge_index, edge_attr):
    """Edge list -> dense adjacency (with self loops, fill_value=0.0) and dense edge feats."""
    src, dst = edge_index[0], edge_index[1]
    adj = jnp.zeros((N, N), jnp.float32).at[dst, src].set(1.0)
    diag = jnp.arange(N)
    adj = adj.at[diag, diag].set(1.0)                              # add self loops
    ea3 = jnp.zeros((N, N, ED), jnp.float32).at[dst, src].set(edge_attr)
    # self-loop edge_attr = fill_value = 0.0 -> already zeros on the diagonal
    return adj, ea3.reshape(N, N * ED)


def build_edge_proj_matrix(w_edge, att_edge):
    """Fold lin_edge + att_edge into B: (N*ED, H*N) with B[j*ED+d, h*N+j] = (W_e @ A_e)[d,h]."""
    wea = w_edge @ att_to_block(att_edge)                          # (ED, H)
    kr = jnp.kron(jnp.eye(N, dtype=jnp.float32), wea)              # (N*ED, N*H), col = j*H + h
    return kr.reshape(N * ED, N, H).transpose(0, 2, 1).reshape(N * ED, N * H)


# --------------------------------------------------------------------------- #
# Pure-JAX reference on the original (sparse) edge list, mirroring PyG GATConv
# --------------------------------------------------------------------------- #
def reference(x, src, dst, eattr, w, att_src, att_dst, att_edge, w_edge, gamma, beta):
    xp = x @ w
    xph = xp.reshape(N, H, C)
    a_s = (xph * att_src[None]).sum(-1)                            # (N, H)
    a_d = (xph * att_dst[None]).sum(-1)
    ef = (eattr @ w_edge).reshape(-1, H, C)
    a_e = (ef * att_edge[None]).sum(-1)                            # (E, H)
    alpha = a_s[src] + a_d[dst] + a_e
    alpha = jnp.where(alpha > 0, alpha, NEG_SLOPE * alpha)
    amax = jax.ops.segment_max(alpha, dst, num_segments=N)
    p = jnp.exp(alpha - amax[dst])
    denom = jax.ops.segment_sum(p, dst, num_segments=N)
    attn = p / denom[dst]
    msg = (xph[src] * attn[:, :, None]).reshape(-1, H * C)
    gat = jax.ops.segment_sum(msg, dst, num_segments=N)            # (N, F)
    mean = gat.mean(axis=0, keepdims=True)
    var = ((gat - mean) ** 2).mean(axis=0, keepdims=True)
    normed = (gat - mean) / jnp.sqrt(var + EPS) * gamma + beta
    out = x + normed
    return jnp.where(out > 0, out, jnp.exp(jnp.minimum(out, 0.0)) - 1.0)


# --------------------------------------------------------------------------- #
if __name__ == "__main__":
    key = jax.random.PRNGKey(0)
    ks = jax.random.split(key, 10)

    # graph topology (shared across the batch): 3 incoming edges per node, no dups/self-loops
    src_l, dst_l = [], []
    for i in range(N):
        for off in (1, 3, 5):
            src_l.append((i + off) % N)
            dst_l.append(i)
    edge_index = jnp.array([src_l, dst_l], dtype=jnp.int32)        # (2, 48)
    E = edge_index.shape[1]

    # batched inputs
    x = jax.random.normal(ks[0], (B, N, F), jnp.float32)
    edge_attr = jax.random.normal(ks[1], (B, E, ED), jnp.float32)

    # deterministic parameter init (synthetic — shapes from GATConv / InstanceNorm)
    w = jax.random.normal(ks[2], (F, H * C), jnp.float32) / jnp.sqrt(F)         # lin (bias=False)
    w_edge = jax.random.normal(ks[3], (ED, H * C), jnp.float32) / jnp.sqrt(ED)  # lin_edge
    att_src = jax.random.normal(ks[4], (H, C), jnp.float32) * 0.3
    att_dst = jax.random.normal(ks[5], (H, C), jnp.float32) * 0.3
    att_edge = jax.random.normal(ks[6], (H, C), jnp.float32) * 0.3
    gamma = 1.0 + 0.1 * jax.random.normal(ks[7], (1, F), jnp.float32)           # InstanceNorm weight
    beta = 0.1 * jax.random.normal(ks[8], (1, F), jnp.float32)                  # InstanceNorm bias

    # pack graphs into flat row-major slabs (B*N rows)
    adj_rows, ea_rows = [], []
    for b in range(B):
        adj_b, ea_b = build_dense_graph(edge_index, edge_attr[b])
        adj_rows.append(jnp.tile(adj_b, (1, H)))                   # (N, H*N) per-head mask
        ea_rows.append(ea_b)
    adj_flat = jnp.concatenate(adj_rows, axis=0)                   # (B*N, H*N)
    ea_flat = jnp.concatenate(ea_rows, axis=0)                     # (B*N, N*ED)
    x_flat = x.reshape(B * N, F)

    # shared parameter / constant operands (built once, resident in VMEM)
    att_cat = jnp.concatenate([jnp.repeat(att_to_block(att_dst), N, axis=1),   # (F, H*N)
                               att_to_block(att_src)], axis=1)                  # (F, H*N+H)
    b_mat = build_edge_proj_matrix(w_edge, att_edge)                            # (N*ED, H*N)
    gsrc = jnp.kron(jnp.eye(H, dtype=jnp.float32),
                    jnp.ones((1, N), jnp.float32))                              # (H, H*N)
    nodemask = jnp.tile(jnp.eye(N, dtype=jnp.float32),
                        (GRAPHS_PER_STEP, H))                                   # (R, H*N)
    gg = jnp.kron(jnp.eye(GRAPHS_PER_STEP, dtype=jnp.float32),
                  jnp.ones((N, N), jnp.float32))                                # (R, R)
    gones = jnp.kron(jnp.eye(H, dtype=jnp.float32),
                     jnp.ones((N, N), jnp.float32))                             # (H*N, H*N)
    colmask = jnp.kron(jnp.eye(GRAPHS_PER_STEP, dtype=jnp.float32),
                       jnp.ones((N, HN), jnp.float32))                          # (R, Bb*H*N)
    rep = jnp.kron(jnp.eye(GRAPHS_PER_STEP, dtype=jnp.float32),
                   jnp.tile(jnp.eye(N, dtype=jnp.float32), (H, 1)))             # (Bb*H*N, R)
    blkmask_big = jnp.tile(jnp.kron(jnp.eye(H, dtype=jnp.float32),
                                    jnp.ones((N, C), jnp.float32)),
                           (GRAPHS_PER_STEP, 1))                                 # (Bb*H*N, F)
    gb = jnp.concatenate([gamma, beta], axis=0)                                  # (2, F)

    out_flat = gat_block_forward(x_flat, ea_flat, adj_flat, w, att_cat, b_mat,
                                 gsrc, nodemask, gg, gones, colmask, rep,
                                 blkmask_big, gb)
    out = jax.block_until_ready(out_flat).reshape(B, N, F)

    # reference on the edge list with self loops appended (fill_value = 0.0), per graph
    loops = jnp.arange(N, dtype=jnp.int32)
    src_full = jnp.concatenate([edge_index[0], loops])
    dst_full = jnp.concatenate([edge_index[1], loops])
    refs = []
    for b in range(B):
        eattr_full = jnp.concatenate([edge_attr[b], jnp.zeros((N, ED), jnp.float32)], axis=0)
        refs.append(reference(x[b], src_full, dst_full, eattr_full, w,
                              att_src, att_dst, att_edge, w_edge, gamma, beta))
    ref = jnp.stack(refs)

    assert out.shape == (B, N, F)
    assert bool(jnp.all(jnp.isfinite(out)))
    # all-f32 path with exact softmax reciprocal -> tolerance tightened from 4e-2 to 1e-3
    np.testing.assert_allclose(np.asarray(out), np.asarray(ref), rtol=1e-3, atol=1e-3)
    print("KERNEL_OK")
</pallas_src>

<mosaic_0001>
module attributes {stable_mosaic.version = 11 : i64} {
  func.func @gat_block_kernel(%arg0: i32, %arg1: memref<64x32xf32, #tpu.memory_space<vmem>>, %arg2: memref<64x128xf32, #tpu.memory_space<vmem>>, %arg3: memref<64x64xf32, #tpu.memory_space<vmem>>, %arg4: memref<32x32xf32, #tpu.memory_space<vmem>>, %arg5: memref<32x68xf32, #tpu.memory_space<vmem>>, %arg6: memref<128x64xf32, #tpu.memory_space<vmem>>, %arg7: memref<4x64xf32, #tpu.memory_space<vmem>>, %arg8: memref<64x64xf32, #tpu.memory_space<vmem>>, %arg9: memref<64x64xf32, #tpu.memory_space<vmem>>, %arg10: memref<64x64xf32, #tpu.memory_space<vmem>>, %arg11: memref<64x256xf32, #tpu.memory_space<vmem>>, %arg12: memref<256x64xf32, #tpu.memory_space<vmem>>, %arg13: memref<256x32xf32, #tpu.memory_space<vmem>>, %arg14: memref<2x32xf32, #tpu.memory_space<vmem>>, %arg15: memref<64x32xf32, #tpu.memory_space<vmem>>) attributes {dimension_semantics = [#tpu.dimension_semantics<parallel>], iteration_bounds = array<i64: 2>, scalar_prefetch = 0 : i64, scratch_operands = 0 : i64, tpu.core_type = #tpu.core_type<tc>, window_params = [{transform_indices = @transform_0, window_bounds = array<i64: 64, 32>}, {transform_indices = @transform_1, window_bounds = array<i64: 64, 128>}, {transform_indices = @transform_2, window_bounds = array<i64: 64, 64>}, {pipeline_mode = #tpu.pipeline_mode<synchronous>, transform_indices = @transform_3, window_bounds = array<i64: 32, 32>}, {pipeline_mode = #tpu.pipeline_mode<synchronous>, transform_indices = @transform_4, window_bounds = array<i64: 32, 68>}, {pipeline_mode = #tpu.pipeline_mode<synchronous>, transform_indices = @transform_5, window_bounds = array<i64: 128, 64>}, {pipeline_mode = #tpu.pipeline_mode<synchronous>, transform_indices = @transform_6, window_bounds = array<i64: 4, 64>}, {pipeline_mode = #tpu.pipeline_mode<synchronous>, transform_indices = @transform_7, window_bounds = array<i64: 64, 64>}, {pipeline_mode = #tpu.pipeline_mode<synchronous>, transform_indices = @transform_8, window_bounds = array<i64: 64, 64>}, {pipeline_mode = #tpu.pipeline_mode<synchronous>, transform_indices = @transform_9, window_bounds = array<i64: 64, 64>}, {pipeline_mode = #tpu.pipeline_mode<synchronous>, transform_indices = @transform_10, window_bounds = array<i64: 64, 256>}, {pipeline_mode = #tpu.pipeline_mode<synchronous>, transform_indices = @transform_11, window_bounds = array<i64: 256, 64>}, {pipeline_mode = #tpu.pipeline_mode<synchronous>, transform_indices = @transform_12, window_bounds = array<i64: 256, 32>}, {pipeline_mode = #tpu.pipeline_mode<synchronous>, transform_indices = @transform_13, window_bounds = array<i64: 2, 32>}, {transform_indices = @transform_14, window_bounds = array<i64: 64, 32>}]} {
    %c0 = arith.constant 0 : index
    %c0_0 = arith.constant 0 : index
    %0 = vector.load %arg1[%c0, %c0_0] : memref<64x32xf32, #tpu.memory_space<vmem>>, vector<64x32xf32>
    %c0_1 = arith.constant 0 : index
    %c0_2 = arith.constant 0 : index
    %1 = vector.load %arg2[%c0_1, %c0_2] : memref<64x128xf32, #tpu.memory_space<vmem>>, vector<64x128xf32>
    %c0_3 = arith.constant 0 : index
    %c0_4 = arith.constant 0 : index
    %2 = vector.load %arg3[%c0_3, %c0_4] : memref<64x64xf32, #tpu.memory_space<vmem>>, vector<64x64xf32>
    %c0_5 = arith.constant 0 : index
    %c0_6 = arith.constant 0 : index
    %3 = vector.load %arg4[%c0_5, %c0_6] : memref<32x32xf32, #tpu.memory_space<vmem>>, vector<32x32xf32>
    %cst = arith.constant dense<0.000000e+00> : vector<64x32xf32>
    %4 = tpu.matmul %0, %3, %cst {dimension_numbers = #tpu.dot_dimension_numbers<[1], [0], [0], [1], [0, 0, 1, 1], [], []>} : vector<64x32xf32>, vector<32x32xf32>, vector<64x32xf32> -> vector<64x32xf32>
    %c0_7 = arith.constant 0 : index
    %c0_8 = arith.constant 0 : index
    %5 = vector.load %arg5[%c0_7, %c0_8] : memref<32x68xf32, #tpu.memory_space<vmem>>, vector<32x68xf32>
    %cst_9 = arith.constant dense<0.000000e+00> : vector<64x68xf32>
    %6 = tpu.matmul %4, %5, %cst_9 {dimension_numbers = #tpu.dot_dimension_numbers<[1], [0], [0], [1], [0, 0, 1, 1], [], []>} : vector<64x32xf32>, vector<32x68xf32>, vector<64x68xf32> -> vector<64x68xf32>
    %7 = vector.extract_strided_slice %6 {offsets = [0, 0], sizes = [64, 64], strides = [1, 1]} : vector<64x68xf32> to vector<64x64xf32>
    %8 = vector.extract_strided_slice %6 {offsets = [0, 64], sizes = [64, 4], strides = [1, 1]} : vector<64x68xf32> to vector<64x4xf32>
    %c0_10 = arith.constant 0 : index
    %c0_11 = arith.constant 0 : index
    %9 = vector.load %arg6[%c0_10, %c0_11] : memref<128x64xf32, #tpu.memory_space<vmem>>, vector<128x64xf32>
    %cst_12 = arith.constant dense<0.000000e+00> : vector<64x64xf32>
    %10 = tpu.matmul %1, %9, %cst_12 {dimension_numbers = #tpu.dot_dimension_numbers<[1], [0], [0], [1], [0, 0, 1, 1], [], []>} : vector<64x128xf32>, vector<128x64xf32>, vector<64x64xf32> -> vector<64x64xf32>
    %c0_13 = arith.constant 0 : index
    %c0_14 = arith.constant 0 : index
    %11 = vector.load %arg7[%c0_13, %c0_14] : memref<4x64xf32, #tpu.memory_space<vmem>>, vector<4x64xf32>
    %cst_15 = arith.constant dense<0.000000e+00> : vector<64x64xf32>
    %12 = tpu.matmul %8, %11, %cst_15 {dimension_numbers = #tpu.dot_dimension_numbers<[1], [0], [0], [1], [0, 0, 1, 1], [], []>} : vector<64x4xf32>, vector<4x64xf32>, vector<64x64xf32> -> vector<64x64xf32>
    %c0_16 = arith.constant 0 : index
    %c0_17 = arith.constant 0 : index
    %13 = vector.load %arg8[%c0_16, %c0_17] : memref<64x64xf32, #tpu.memory_space<vmem>>, vector<64x64xf32>
    %14 = arith.mulf %12, %13 : vector<64x64xf32>
    %c0_18 = arith.constant 0 : index
    %c0_19 = arith.constant 0 : index
    %15 = vector.load %arg9[%c0_18, %c0_19] : memref<64x64xf32, #tpu.memory_space<vmem>>, vector<64x64xf32>
    %cst_20 = arith.constant dense<0.000000e+00> : vector<64x64xf32>
    %16 = tpu.matmul %15, %14, %cst_20 {dimension_numbers = #tpu.dot_dimension_numbers<[1], [0], [0], [1], [0, 0, 1, 1], [], []>} : vector<64x64xf32>, vector<64x64xf32>, vector<64x64xf32> -> vector<64x64xf32>
    %17 = arith.addf %7, %10 : vector<64x64xf32>
    %18 = arith.addf %17, %16 : vector<64x64xf32>
    %cst_21 = arith.constant 0.000000e+00 : f32
    %19 = vector.broadcast %cst_21 : f32 to vector<64x64xf32>
    %20 = arith.cmpf ogt, %18, %19 : vector<64x64xf32>
    %cst_22 = arith.constant 2.000000e-01 : f32
    %21 = vector.broadcast %cst_22 : f32 to vector<64x64xf32>
    %22 = arith.mulf %21, %18 : vector<64x64xf32>
    %23 = arith.select %20, %18, %22 : vector<64x64xi1>, vector<64x64xf32>
    %cst_23 = arith.constant 0.000000e+00 : f32
    %24 = vector.broadcast %cst_23 : f32 to vector<64x64xf32>
    %25 = arith.cmpf ogt, %2, %24 : vector<64x64xf32>
    %cst_24 = arith.constant -1.000000e+30 : f32
    %26 = vector.broadcast %cst_24 : f32 to vector<64x64xf32>
    %27 = arith.select %25, %23, %26 : vector<64x64xi1>, vector<64x64xf32>
    %cst_25 = arith.constant dense<0xFF800000> : vector<64xf32>
    %28 = vector.multi_reduction <maximumf>, %27, %cst_25 [1] : vector<64x64xf32> to vector<64xf32>
    %29 = vector.shape_cast %28 : vector<64xf32> to vector<64x1xf32>
    %30 = vector.broadcast %29 : vector<64x1xf32> to vector<64x64xf32>
    %31 = arith.subf %27, %30 : vector<64x64xf32>
    %32 = math.exp %31 : vector<64x64xf32>
    %33 = arith.mulf %32, %2 : vector<64x64xf32>
    %c0_26 = arith.constant 0 : index
    %c0_27 = arith.constant 0 : index
    %34 = vector.load %arg10[%c0_26, %c0_27] : memref<64x64xf32, #tpu.memory_space<vmem>>, vector<64x64xf32>
    %cst_28 = arith.constant dense<0.000000e+00> : vector<64x64xf32>
    %35 = tpu.matmul %33, %34, %cst_28 {dimension_numbers = #tpu.dot_dimension_numbers<[1], [0], [0], [1], [0, 0, 1, 1], [], []>} : vector<64x64xf32>, vector<64x64xf32>, vector<64x64xf32> -> vector<64x64xf32>
    %cst_29 = arith.constant 9.99999968E-21 : f32
    %36 = vector.broadcast %cst_29 : f32 to vector<64x64xf32>
    %37 = arith.maximumf %35, %36 : vector<64x64xf32>
    %38 = tpu.reciprocal %37 : vector<64x64xf32> -> vector<64x64xf32>
    %39 = arith.mulf %33, %38 : vector<64x64xf32>
    %40 = tpu.concatenate %39, %39, %39, %39 in 1 : vector<64x64xf32>, vector<64x64xf32>, vector<64x64xf32>, vector<64x64xf32> -> vector<64x256xf32>
    %c0_30 = arith.constant 0 : index
    %c0_31 = arith.constant 0 : index
    %41 = vector.load %arg11[%c0_30, %c0_31] : memref<64x256xf32, #tpu.memory_space<vmem>>, vector<64x256xf32>
    %42 = arith.mulf %40, %41 : vector<64x256xf32>
    %c0_32 = arith.constant 0 : index
    %c0_33 = arith.constant 0 : index
    %43 = vector.load %arg12[%c0_32, %c0_33] : memref<256x64xf32, #tpu.memory_space<vmem>>, vector<256x64xf32>
    %cst_34 = arith.constant dense<0.000000e+00> : vector<256x32xf32>
    %44 = tpu.matmul %43, %4, %cst_34 {dimension_numbers = #tpu.dot_dimension_numbers<[1], [0], [0], [1], [0, 0, 1, 1], [], []>} : vector<256x64xf32>, vector<64x32xf32>, vector<256x32xf32> -> vector<256x32xf32>
    %c0_35 = arith.constant 0 : index
    %c0_36 = arith.constant 0 : index
    %45 = vector.load %arg13[%c0_35, %c0_36] : memref<256x32xf32, #tpu.memory_space<vmem>>, vector<256x32xf32>
    %46 = arith.mulf %44, %45 : vector<256x32xf32>
    %cst_37 = arith.constant dense<0.000000e+00> : vector<64x32xf32>
    %47 = tpu.matmul %42, %46, %cst_37 {dimension_numbers = #tpu.dot_dimension_numbers<[1], [0], [0], [1], [0, 0, 1, 1], [], []>} : vector<64x256xf32>, vector<256x32xf32>, vector<64x32xf32> -> vector<64x32xf32>
    %c0_38 = arith.constant 0 : index
    %c0_39 = arith.constant 0 : index
    %48 = vector.load %arg9[%c0_38, %c0_39] : memref<64x64xf32, #tpu.memory_space<vmem>>, vector<64x64xf32>
    %cst_40 = arith.constant dense<0.000000e+00> : vector<64x32xf32>
    %49 = tpu.matmul %48, %47, %cst_40 {dimension_numbers = #tpu.dot_dimension_numbers<[1], [0], [0], [1], [0, 0, 1, 1], [], []>} : vector<64x64xf32>, vector<64x32xf32>, vector<64x32xf32> -> vector<64x32xf32>
    %cst_41 = arith.constant 6.250000e-02 : f32
    %50 = vector.broadcast %cst_41 : f32 to vector<64x32xf32>
    %51 = arith.mulf %49, %50 : vector<64x32xf32>
    %52 = arith.subf %47, %51 : vector<64x32xf32>
    %c0_42 = arith.constant 0 : index
    %c0_43 = arith.constant 0 : index
    %53 = vector.load %arg9[%c0_42, %c0_43] : memref<64x64xf32, #tpu.memory_space<vmem>>, vector<64x64xf32>
    %54 = arith.mulf %52, %52 : vector<64x32xf32>
    %cst_44 = arith.constant dense<0.000000e+00> : vector<64x32xf32>
    %55 = tpu.matmul %53, %54, %cst_44 {dimension_numbers = #tpu.dot_dimension_numbers<[1], [0], [0], [1], [0, 0, 1, 1], [], []>} : vector<64x64xf32>, vector<64x32xf32>, vector<64x32xf32> -> vector<64x32xf32>
    %cst_45 = arith.constant 6.250000e-02 : f32
    %56 = vector.broadcast %cst_45 : f32 to vector<64x32xf32>
    %57 = arith.mulf %55, %56 : vector<64x32xf32>
    %cst_46 = arith.constant 9.99999974E-6 : f32
    %58 = vector.broadcast %cst_46 : f32 to vector<64x32xf32>
    %59 = arith.addf %57, %58 : vector<64x32xf32>
    %60 = math.rsqrt %59 : vector<64x32xf32>
    %61 = arith.mulf %52, %60 : vector<64x32xf32>
    %c0_47 = arith.constant 0 : index
    %c0_48 = arith.constant 0 : index
    %62 = vector.load %arg14[%c0_47, %c0_48] : memref<2x32xf32, #tpu.memory_space<vmem>>, vector<1x32xf32>
    %63 = vector.broadcast %62 : vector<1x32xf32> to vector<64x32xf32>
    %64 = arith.mulf %61, %63 : vector<64x32xf32>
    %c1 = arith.constant 1 : index
    %c0_49 = arith.constant 0 : index
    %65 = vector.load %arg14[%c1, %c0_49] : memref<2x32xf32, #tpu.memory_space<vmem>>, vector<1x32xf32>
    %66 = vector.broadcast %65 : vector<1x32xf32> to vector<64x32xf32>
    %67 = arith.addf %64, %66 : vector<64x32xf32>
    %68 = arith.addf %0, %67 : vector<64x32xf32>
    %cst_50 = arith.constant 0.000000e+00 : f32
    %69 = vector.broadcast %cst_50 : f32 to vector<64x32xf32>
    %70 = arith.cmpf ogt, %68, %69 : vector<64x32xf32>
    %cst_51 = arith.constant 0.000000e+00 : f32
    %71 = vector.broadcast %cst_51 : f32 to vector<64x32xf32>
    %72 = arith.minimumf %68, %71 : vector<64x32xf32>
    %73 = math.exp %72 : vector<64x32xf32>
    %cst_52 = arith.constant 1.000000e+00 : f32
    %74 = vector.broadcast %cst_52 : f32 to vector<64x32xf32>
    %75 = arith.subf %73, %74 : vector<64x32xf32>
    %76 = arith.select %70, %68, %75 : vector<64x32xi1>, vector<64x32xf32>
    %c0_53 = arith.constant 0 : index
    %c0_54 = arith.constant 0 : index
    %77 = vector.load %arg15[%c0_53, %c0_54] : memref<64x32xf32, #tpu.memory_space<vmem>>, vector<64x32xf32>
    tpu.vector_store %arg15[%c0_53, %c0_54], %76 {strides = array<i32>} : memref<64x32xf32, #tpu.memory_space<vmem>>, vector<64x32xf32>,
    return
  }
  func.func @transform_0(%arg0: i32) -> (i32, i32) {
    %c0_i32 = arith.constant 0 : i32
    %c0_i32_0 = arith.constant 0 : i32
    return %arg0, %c0_i32 : i32, i32
  }
  func.func @transform_1(%arg0: i32) -> (i32, i32) {
    %c0_i32 = arith.constant 0 : i32
    %c0_i32_0 = arith.constant 0 : i32
    return %arg0, %c0_i32 : i32, i32
  }
  func.func @transform_2(%arg0: i32) -> (i32, i32) {
    %c0_i32 = arith.constant 0 : i32
    %c0_i32_0 = arith.constant 0 : i32
    return %arg0, %c0_i32 : i32, i32
  }
  func.func @transform_3(%arg0: i32) -> (i32, i32) {
    %c0_i32 = arith.constant 0 : i32
    %c0_i32_0 = arith.constant 0 : i32
    %c0_i32_1 = arith.constant 0 : i32
    return %c0_i32, %c0_i32_0 : i32, i32
  }
  func.func @transform_4(%arg0: i32) -> (i32, i32) {
    %c0_i32 = arith.constant 0 : i32
    %c0_i32_0 = arith.constant 0 : i32
    %c0_i32_1 = arith.constant 0 : i32
    return %c0_i32, %c0_i32_0 : i32, i32
  }
  func.func @transform_5(%arg0: i32) -> (i32, i32) {
    %c0_i32 = arith.constant 0 : i32
    %c0_i32_0 = arith.constant 0 : i32
    %c0_i32_1 = arith.constant 0 : i32
    return %c0_i32, %c0_i32_0 : i32, i32
  }
  func.func @transform_6(%arg0: i32) -> (i32, i32) {
    %c0_i32 = arith.constant 0 : i32
    %c0_i32_0 = arith.constant 0 : i32
    %c0_i32_1 = arith.constant 0 : i32
    return %c0_i32, %c0_i32_0 : i32, i32
  }
  func.func @transform_7(%arg0: i32) -> (i32, i32) {
    %c0_i32 = arith.constant 0 : i32
    %c0_i32_0 = arith.constant 0 : i32
    %c0_i32_1 = arith.constant 0 : i32
    return %c0_i32, %c0_i32_0 : i32, i32
  }
  func.func @transform_8(%arg0: i32) -> (i32, i32) {
    %c0_i32 = arith.constant 0 : i32
    %c0_i32_0 = arith.constant 0 : i32
    %c0_i32_1 = arith.constant 0 : i32
    return %c0_i32, %c0_i32_0 : i32, i32
  }
  func.func @transform_9(%arg0: i32) -> (i32, i32) {
    %c0_i32 = arith.constant 0 : i32
    %c0_i32_0 = arith.constant 0 : i32
    %c0_i32_1 = arith.constant 0 : i32
    return %c0_i32, %c0_i32_0 : i32, i32
  }
  func.func @transform_10(%arg0: i32) -> (i32, i32) {
    %c0_i32 = arith.constant 0 : i32
    %c0_i32_0 = arith.constant 0 : i32
    %c0_i32_1 = arith.constant 0 : i32
    return %c0_i32, %c0_i32_0 : i32, i32
  }
  func.func @transform_11(%arg0: i32) -> (i32, i32) {
    %c0_i32 = arith.constant 0 : i32
    %c0_i32_0 = arith.constant 0 : i32
    %c0_i32_1 = arith.constant 0 : i32
    return %c0_i32, %c0_i32_0 : i32, i32
  }
  func.func @transform_12(%arg0: i32) -> (i32, i32) {
    %c0_i32 = arith.constant 0 : i32
    %c0_i32_0 = arith.constant 0 : i32
    %c0_i32_1 = arith.constant 0 : i32
    return %c0_i32, %c0_i32_0 : i32, i32
  }
  func.func @transform_13(%arg0: i32) -> (i32, i32) {
    %c0_i32 = arith.constant 0 : i32
    %c0_i32_0 = arith.constant 0 : i32
    %c0_i32_1 = arith.constant 0 : i32
    return %c0_i32, %c0_i32_0 : i32, i32
  }
  func.func @transform_14(%arg0: i32) -> (i32, i32) {
    %c0_i32 = arith.constant 0 : i32
    %c0_i32_0 = arith.constant 0 : i32
    return %arg0, %c0_i32 : i32, i32
  }
}

</mosaic_0001>

<llo_original>
// kernel: tpu_custom_call.1
$region0: #{tpu_custom_call.1}
  #allocation0 [shape = 'u32[]', space=smem, size = 0x4, offset = 0x4, fixed_abs, tag = 'smem constant byte address 0x4 - core index']
  #allocation1 [shape = 'u32[72,128]{1,0:T(1,128)}', space=vmem, size = 0x9000, scoped, tag = 'internal scratch']
  %s0 = inlined_call_operand.vmem [shape: f32[128,32], index: 0, kind: input, shape index: {}]
  %s1 = inlined_call_operand.vmem [shape: f32[128,128], index: 1, kind: input, shape index: {}]
  %s2 = inlined_call_operand.vmem [shape: f32[128,64], index: 2, kind: input, shape index: {}]
  %s3 = inlined_call_operand.vmem [shape: f32[32,32], index: 3, kind: input, shape index: {}]
  %s4 = inlined_call_operand.vmem [shape: f32[32,68], index: 4, kind: input, shape index: {}]
  %s5 = inlined_call_operand.vmem [shape: f32[128,64], index: 5, kind: input, shape index: {}]
  %s6 = inlined_call_operand.vmem [shape: f32[4,64], index: 6, kind: input, shape index: {}]
  %s7 = inlined_call_operand.vmem [shape: f32[64,64], index: 7, kind: input, shape index: {}]
  %s8 = inlined_call_operand.vmem [shape: f32[64,64], index: 8, kind: input, shape index: {}]
  %s9 = inlined_call_operand.vmem [shape: f32[64,64], index: 9, kind: input, shape index: {}]
  %s10 = inlined_call_operand.vmem [shape: f32[64,256], index: 10, kind: input, shape index: {}]
  %s11 = inlined_call_operand.vmem [shape: f32[256,64], index: 11, kind: input, shape index: {}]
  %s12 = inlined_call_operand.vmem [shape: f32[256,32], index: 12, kind: input, shape index: {}]
  %s13 = inlined_call_operand.vmem [shape: f32[2,32], index: 13, kind: input, shape index: {}]
  %s14 = inlined_call_operand.vmem [shape: f32[128,32], index: 14, kind: output, shape index: {}]
  %s15 = sld [smem:[#allocation0]]
  $region89: #{tpu_custom_call.1} parent=0
    _
  %s17 = ssub.s32 1, %s15
  %s18 = scalar_select 0, %s17, %s15
  loop: start=0, step=1, limit=4
  $region2: #{tpu_custom_call.1} parent=0 // loop_pre_header
    _
  $region3: #{tpu_custom_call.1} parent=0 // loop_header
    %s20 = sphi 0, %s24
    %p21 = scmp.ge.s32.totalorder %s20, 4
    %s30 = sphi 0, %s32
    %s33 = sphi 0, %s30
    %s34 = sphi 0, %s33
    %s50 = sphi 0, %s34
    %s56 = sphi 0, %s58
    %s59 = sphi 0, %s56
    %s60 = sphi 0, %s59
    %s76 = sphi 0, %s60
    %s82 = sphi 0, %s84
    %s85 = sphi 0, %s82
    %s86 = sphi 0, %s85
    %s102 = sphi 0, %s86
    %s106 = sphi 0, %s106
    %s108 = sphi 0, %s106
    %s109 = sphi 0, %s108
    %s123 = sphi 0, %s109
    %s127 = sphi 0, %s127
    %s129 = sphi 0, %s127
    %s130 = sphi 0, %s129
    %s144 = sphi 0, %s130
    %s148 = sphi 0, %s148
    %s150 = sphi 0, %s148
    %s151 = sphi 0, %s150
    %s165 = sphi 0, %s151
    %s169 = sphi 0, %s169
    %s171 = sphi 0, %s169
    %s172 = sphi 0, %s171
    %s186 = sphi 0, %s172
    %s190 = sphi 0, %s190
    %s192 = sphi 0, %s190
    %s193 = sphi 0, %s192
    %s207 = sphi 0, %s193
    %s211 = sphi 0, %s211
    %s213 = sphi 0, %s211
    %s214 = sphi 0, %s213
    %s228 = sphi 0, %s214
    %s232 = sphi 0, %s232
    %s234 = sphi 0, %s232
    %s235 = sphi 0, %s234
    %s249 = sphi 0, %s235
    %s253 = sphi 0, %s253
    %s255 = sphi 0, %s253
    %s256 = sphi 0, %s255
    %s270 = sphi 0, %s256
    %s274 = sphi 0, %s274
    %s276 = sphi 0, %s274
    %s277 = sphi 0, %s276
    %s291 = sphi 0, %s277
    %s295 = sphi 0, %s295
    %s297 = sphi 0, %s295
    %s298 = sphi 0, %s297
    %s312 = sphi 0, %s298
    %s316 = sphi 0, %s316
    %s318 = sphi 0, %s316
    %s319 = sphi 0, %s318
    %s333 = sphi 0, %s319
    %s339 = sphi 0, %s341
    %s342 = sphi 0, %s339
    %s343 = sphi 0, %s342
    %s359 = sphi 0, %s343
  $region4: #{tpu_custom_call.1} parent=0 // loop_header_branch
    %23 = sbr.rel (%p21) target = $region8
  $region5: #{tpu_custom_call.1} parent=0 // loop_body
    %s25 = ssub.s32 %s20, 1
    %s26 = ssub.s32 %s20, 2
    %s27 = sadd.s32 %s20, 1
    %s28 = ssub.s32 %s20, %s27
    %p29 = scmp.eq.s32.totalorder %s28, 0
    %s31 = sadd.s32 %s30, 1
    %s32 = scalar_select %p29, %s30, %s31
    %p35 = pneg %p29
    %p36 = scmp.eq.s32.totalorder %s20, 1
    %p37 = por %p35, %p36
    %p38 = scmp.ne.s32.totalorder %s30, %s33
    %p39 = scmp.eq.s32.totalorder %s20, 0
    %p40 = por %p38, %p39
    %p41 = scmp.ne.s32.totalorder %s30, %s33
    %p42 = scmp.eq.s32.totalorder %s25, 1
    %p43 = por %p41, %p42
    %p44 = scmp.ne.s32.totalorder %s33, %s34
    %p45 = scmp.eq.s32.totalorder %s25, 0
    %p46 = por %p44, %p45
    %p47 = scmp.ne.s32.totalorder %s33, %s34
    %p48 = scmp.eq.s32.totalorder %s26, 1
    %p49 = por %p47, %p48
    %p51 = scmp.ne.s32.totalorder %s34, %s50
    %p52 = scmp.eq.s32.totalorder %s26, 0
    %p53 = por %p51, %p52
    %s54 = ssub.s32 %s20, %s27
    %p55 = scmp.eq.s32.totalorder %s54, 0
    %s57 = sadd.s32 %s56, 1
    %s58 = scalar_select %p55, %s56, %s57
    %p61 = pneg %p55
    %p62 = scmp.eq.s32.totalorder %s20, 1
    %p63 = por %p61, %p62
    %p64 = scmp.ne.s32.totalorder %s56, %s59
    %p65 = scmp.eq.s32.totalorder %s20, 0
    %p66 = por %p64, %p65
    %p67 = scmp.ne.s32.totalorder %s56, %s59
    %p68 = scmp.eq.s32.totalorder %s25, 1
    %p69 = por %p67, %p68
    %p70 = scmp.ne.s32.totalorder %s59, %s60
    %p71 = scmp.eq.s32.totalorder %s25, 0
    %p72 = por %p70, %p71
    %p73 = scmp.ne.s32.totalorder %s59, %s60
    %p74 = scmp.eq.s32.totalorder %s26, 1
    %p75 = por %p73, %p74
    %p77 = scmp.ne.s32.totalorder %s60, %s76
    %p78 = scmp.eq.s32.totalorder %s26, 0
    %p79 = por %p77, %p78
    %s80 = ssub.s32 %s20, %s27
    %p81 = scmp.eq.s32.totalorder %s80, 0
    %s83 = sadd.s32 %s82, 1
    %s84 = scalar_select %p81, %s82, %s83
    %p87 = pneg %p81
    %p88 = scmp.eq.s32.totalorder %s20, 1
    %p89 = por %p87, %p88
    %p90 = scmp.ne.s32.totalorder %s82, %s85
    %p91 = scmp.eq.s32.totalorder %s20, 0
    %p92 = por %p90, %p91
    %p93 = scmp.ne.s32.totalorder %s82, %s85
    %p94 = scmp.eq.s32.totalorder %s25, 1
    %p95 = por %p93, %p94
    %p96 = scmp.ne.s32.totalorder %s85, %s86
    %p97 = scmp.eq.s32.totalorder %s25, 0
    %p98 = por %p96, %p97
    %p99 = scmp.ne.s32.totalorder %s85, %s86
    %p100 = scmp.eq.s32.totalorder %s26, 1
    %p101 = por %p99, %p100
    %p103 = scmp.ne.s32.totalorder %s86, %s102
    %p104 = scmp.eq.s32.totalorder %s26, 0
    %p105 = por %p103, %p104
    %s107 = sadd.s32 %s106, 1
    %p110 = scmp.eq.s32.totalorder %s20, 1
    %p111 = scmp.ne.s32.totalorder %s106, %s108
    %p112 = scmp.eq.s32.totalorder %s20, 0
    %p113 = por %p111, %p112
    %p114 = scmp.ne.s32.totalorder %s106, %s108
    %p115 = scmp.eq.s32.totalorder %s25, 1
    %p116 = por %p114, %p115
    %p117 = scmp.ne.s32.totalorder %s108, %s109
    %p118 = scmp.eq.s32.totalorder %s25, 0
    %p119 = por %p117, %p118
    %p120 = scmp.ne.s32.totalorder %s108, %s109
    %p121 = scmp.eq.s32.totalorder %s26, 1
    %p122 = por %p120, %p121
    %p124 = scmp.ne.s32.totalorder %s109, %s123
    %p125 = scmp.eq.s32.totalorder %s26, 0
    %p126 = por %p124, %p125
    %s128 = sadd.s32 %s127, 1
    %p131 = scmp.eq.s32.totalorder %s20, 1
    %p132 = scmp.ne.s32.totalorder %s127, %s129
    %p133 = scmp.eq.s32.totalorder %s20, 0
    %p134 = por %p132, %p133
    %p135 = scmp.ne.s32.totalorder %s127, %s129
    %p136 = scmp.eq.s32.totalorder %s25, 1
    %p137 = por %p135, %p136
    %p138 = scmp.ne.s32.totalorder %s129, %s130
    %p139 = scmp.eq.s32.totalorder %s25, 0
    %p140 = por %p138, %p139
    %p141 = scmp.ne.s32.totalorder %s129, %s130
    %p142 = scmp.eq.s32.totalorder %s26, 1
    %p143 = por %p141, %p142
    %p145 = scmp.ne.s32.totalorder %s130, %s144
    %p146 = scmp.eq.s32.totalorder %s26, 0
    %p147 = por %p145, %p146
    %s149 = sadd.s32 %s148, 1
    %p152 = scmp.eq.s32.totalorder %s20, 1
    %p153 = scmp.ne.s32.totalorder %s148, %s150
    %p154 = scmp.eq.s32.totalorder %s20, 0
    %p155 = por %p153, %p154
    %p156 = scmp.ne.s32.totalorder %s148, %s150
    %p157 = scmp.eq.s32.totalorder %s25, 1
    %p158 = por %p156, %p157
    %p159 = scmp.ne.s32.totalorder %s150, %s151
    %p160 = scmp.eq.s32.totalorder %s25, 0
    %p161 = por %p159, %p160
    %p162 = scmp.ne.s32.totalorder %s150, %s151
    %p163 = scmp.eq.s32.totalorder %s26, 1
    %p164 = por %p162, %p163
    %p166 = scmp.ne.s32.totalorder %s151, %s165
    %p167 = scmp.eq.s32.totalorder %s26, 0
    %p168 = por %p166, %p167
    %s170 = sadd.s32 %s169, 1
    %p173 = scmp.eq.s32.totalorder %s20, 1
    %p174 = scmp.ne.s32.totalorder %s169, %s171
    %p175 = scmp.eq.s32.totalorder %s20, 0
    %p176 = por %p174, %p175
    %p177 = scmp.ne.s32.totalorder %s169, %s171
    %p178 = scmp.eq.s32.totalorder %s25, 1
    %p179 = por %p177, %p178
    %p180 = scmp.ne.s32.totalorder %s171, %s172
    %p181 = scmp.eq.s32.totalorder %s25, 0
    %p182 = por %p180, %p181
    %p183 = scmp.ne.s32.totalorder %s171, %s172
    %p184 = scmp.eq.s32.totalorder %s26, 1
    %p185 = por %p183, %p184
    %p187 = scmp.ne.s32.totalorder %s172, %s186
    %p188 = scmp.eq.s32.totalorder %s26, 0
    %p189 = por %p187, %p188
    %s191 = sadd.s32 %s190, 1
    %p194 = scmp.eq.s32.totalorder %s20, 1
    %p195 = scmp.ne.s32.totalorder %s190, %s192
    %p196 = scmp.eq.s32.totalorder %s20, 0
    %p197 = por %p195, %p196
    %p198 = scmp.ne.s32.totalorder %s190, %s192
    %p199 = scmp.eq.s32.totalorder %s25, 1
    %p200 = por %p198, %p199
    %p201 = scmp.ne.s32.totalorder %s192, %s193
    %p202 = scmp.eq.s32.totalorder %s25, 0
    %p203 = por %p201, %p202
    %p204 = scmp.ne.s32.totalorder %s192, %s193
    %p205 = scmp.eq.s32.totalorder %s26, 1
    %p206 = por %p204, %p205
    %p208 = scmp.ne.s32.totalorder %s193, %s207
    %p209 = scmp.eq.s32.totalorder %s26, 0
    %p210 = por %p208, %p209
    %s212 = sadd.s32 %s211, 1
    %p215 = scmp.eq.s32.totalorder %s20, 1
    %p216 = scmp.ne.s32.totalorder %s211, %s213
    %p217 = scmp.eq.s32.totalorder %s20, 0
    %p218 = por %p216, %p217
    %p219 = scmp.ne.s32.totalorder %s211, %s213
    %p220 = scmp.eq.s32.totalorder %s25, 1
    %p221 = por %p219, %p220
    %p222 = scmp.ne.s32.totalorder %s213, %s214
    %p223 = scmp.eq.s32.totalorder %s25, 0
    %p224 = por %p222, %p223
    %p225 = scmp.ne.s32.totalorder %s213, %s214
    %p226 = scmp.eq.s32.totalorder %s26, 1
    %p227 = por %p225, %p226
    %p229 = scmp.ne.s32.totalorder %s214, %s228
    %p230 = scmp.eq.s32.totalorder %s26, 0
    %p231 = por %p229, %p230
    %s233 = sadd.s32 %s232, 1
    %p236 = scmp.eq.s32.totalorder %s20, 1
    %p237 = scmp.ne.s32.totalorder %s232, %s234
    %p238 = scmp.eq.s32.totalorder %s20, 0
    %p239 = por %p237, %p238
    %p240 = scmp.ne.s32.totalorder %s232, %s234
    %p241 = scmp.eq.s32.totalorder %s25, 1
    %p242 = por %p240, %p241
    %p243 = scmp.ne.s32.totalorder %s234, %s235
    %p244 = scmp.eq.s32.totalorder %s25, 0
    %p245 = por %p243, %p244
    %p246 = scmp.ne.s32.totalorder %s234, %s235
    %p247 = scmp.eq.s32.totalorder %s26, 1
    %p248 = por %p246, %p247
    %p250 = scmp.ne.s32.totalorder %s235, %s249
    %p251 = scmp.eq.s32.totalorder %s26, 0
    %p252 = por %p250, %p251
    %s254 = sadd.s32 %s253, 1
    %p257 = scmp.eq.s32.totalorder %s20, 1
    %p258 = scmp.ne.s32.totalorder %s253, %s255
    %p259 = scmp.eq.s32.totalorder %s20, 0
    %p260 = por %p258, %p259
    %p261 = scmp.ne.s32.totalorder %s253, %s255
    %p262 = scmp.eq.s32.totalorder %s25, 1
    %p263 = por %p261, %p262
    %p264 = scmp.ne.s32.totalorder %s255, %s256
    %p265 = scmp.eq.s32.totalorder %s25, 0
    %p266 = por %p264, %p265
    %p267 = scmp.ne.s32.totalorder %s255, %s256
    %p268 = scmp.eq.s32.totalorder %s26, 1
    %p269 = por %p267, %p268
    %p271 = scmp.ne.s32.totalorder %s256, %s270
    %p272 = scmp.eq.s32.totalorder %s26, 0
    %p273 = por %p271, %p272
    %s275 = sadd.s32 %s274, 1
    %p278 = scmp.eq.s32.totalorder %s20, 1
    %p279 = scmp.ne.s32.totalorder %s274, %s276
    %p280 = scmp.eq.s32.totalorder %s20, 0
    %p281 = por %p279, %p280
    %p282 = scmp.ne.s32.totalorder %s274, %s276
    %p283 = scmp.eq.s32.totalorder %s25, 1
    %p284 = por %p282, %p283
    %p285 = scmp.ne.s32.totalorder %s276, %s277
    %p286 = scmp.eq.s32.totalorder %s25, 0
    %p287 = por %p285, %p286
    %p288 = scmp.ne.s32.totalorder %s276, %s277
    %p289 = scmp.eq.s32.totalorder %s26, 1
    %p290 = por %p288, %p289
    %p292 = scmp.ne.s32.totalorder %s277, %s291
    %p293 = scmp.eq.s32.totalorder %s26, 0
    %p294 = por %p292, %p293
    %s296 = sadd.s32 %s295, 1
    %p299 = scmp.eq.s32.totalorder %s20, 1
    %p300 = scmp.ne.s32.totalorder %s295, %s297
    %p301 = scmp.eq.s32.totalorder %s20, 0
    %p302 = por %p300, %p301
    %p303 = scmp.ne.s32.totalorder %s295, %s297
    %p304 = scmp.eq.s32.totalorder %s25, 1
    %p305 = por %p303, %p304
    %p306 = scmp.ne.s32.totalorder %s297, %s298
    %p307 = scmp.eq.s32.totalorder %s25, 0
    %p308 = por %p306, %p307
    %p309 = scmp.ne.s32.totalorder %s297, %s298
    %p310 = scmp.eq.s32.totalorder %s26, 1
    %p311 = por %p309, %p310
    %p313 = scmp.ne.s32.totalorder %s298, %s312
    %p314 = scmp.eq.s32.totalorder %s26, 0
    %p315 = por %p313, %p314
    %s317 = sadd.s32 %s316, 1
    %p320 = scmp.eq.s32.totalorder %s20, 1
    %p321 = scmp.ne.s32.totalorder %s316, %s318
    %p322 = scmp.eq.s32.totalorder %s20, 0
    %p323 = por %p321, %p322
    %p324 = scmp.ne.s32.totalorder %s316, %s318
    %p325 = scmp.eq.s32.totalorder %s25, 1
    %p326 = por %p324, %p325
    %p327 = scmp.ne.s32.totalorder %s318, %s319
    %p328 = scmp.eq.s32.totalorder %s25, 0
    %p329 = por %p327, %p328
    %p330 = scmp.ne.s32.totalorder %s318, %s319
    %p331 = scmp.eq.s32.totalorder %s26, 1
    %p332 = por %p330, %p331
    %p334 = scmp.ne.s32.totalorder %s319, %s333
    %p335 = scmp.eq.s32.totalorder %s26, 0
    %p336 = por %p334, %p335
    %s337 = ssub.s32 %s20, %s27
    %p338 = scmp.eq.s32.totalorder %s337, 0
    %s340 = sadd.s32 %s339, 1
    %s341 = scalar_select %p338, %s339, %s340
    %p344 = pneg %p338
    %p345 = scmp.eq.s32.totalorder %s20, 1
    %p346 = por %p344, %p345
    %p347 = scmp.ne.s32.totalorder %s339, %s342
    %p348 = scmp.eq.s32.totalorder %s20, 0
    %p349 = por %p347, %p348
    %p350 = scmp.ne.s32.totalorder %s339, %s342
    %p351 = scmp.eq.s32.totalorder %s25, 1
    %p352 = por %p350, %p351
    %p353 = scmp.ne.s32.totalorder %s342, %s343
    %p354 = scmp.eq.s32.totalorder %s25, 0
    %p355 = por %p353, %p354
    %p356 = scmp.ne.s32.totalorder %s342, %s343
    %p357 = scmp.eq.s32.totalorder %s26, 1
    %p358 = por %p356, %p357
    %p360 = scmp.ne.s32.totalorder %s343, %s359
    %p361 = scmp.eq.s32.totalorder %s26, 0
    %p362 = por %p360, %p361
    %p363 = scmp.le.s32.totalorder 1, %s20
    %p364 = scmp.lt.s32.totalorder %s20, 3
    %p365 = pnand %p363, %p364
    %p366 = pneg %p365
    // Predicated region
    $region9: #{tpu_custom_call.1} parent=5 // pred_check
      _
    $region10: #{tpu_custom_call.1} parent=5 // pred_check_branch
      %368 = sbr.rel (%p365) target = $region12
    $region11: #{tpu_custom_call.1} parent=5 // pred_region
      %s369 = ssub.s32 %s20, 1
      // Predicated region
      $region13: #{tpu_custom_call.1} parent=11 // pred_check
        %p370 = pneg %p119
      $region14: #{tpu_custom_call.1} parent=11 // pred_check_branch
        %372 = sbr.rel (%p370) target = $region16
      $region15: #{tpu_custom_call.1} parent=11 // pred_region
        _
      $region16: #{tpu_custom_call.1} parent=11 // pred_fallthru
        _
      // Predicated region
      $region17: #{tpu_custom_call.1} parent=11 // pred_check
        %p373 = pneg %p140
      $region18: #{tpu_custom_call.1} parent=11 // pred_check_branch
        %375 = sbr.rel (%p373) target = $region20
      $region19: #{tpu_custom_call.1} parent=11 // pred_region
        _
      $region20: #{tpu_custom_call.1} parent=11 // pred_fallthru
        _
      // Predicated region
      $region21: #{tpu_custom_call.1} parent=11 // pred_check
        %p376 = pneg %p161
      $region22: #{tpu_custom_call.1} parent=11 // pred_check_branch
        %378 = sbr.rel (%p376) target = $region24
      $region23: #{tpu_custom_call.1} parent=11 // pred_region
        _
      $region24: #{tpu_custom_call.1} parent=11 // pred_fallthru
        _
      // Predicated region
      $region25: #{tpu_custom_call.1} parent=11 // pred_check
        %p379 = pneg %p182
      $region26: #{tpu_custom_call.1} parent=11 // pred_check_branch
        %381 = sbr.rel (%p379) target = $region28
      $region27: #{tpu_custom_call.1} parent=11 // pred_region
        _
      $region28: #{tpu_custom_call.1} parent=11 // pred_fallthru
        _
      // Predicated region
      $region29: #{tpu_custom_call.1} parent=11 // pred_check
        %p382 = pneg %p203
      $region30: #{tpu_custom_call.1} parent=11 // pred_check_branch
        %384 = sbr.rel (%p382) target = $region32
      $region31: #{tpu_custom_call.1} parent=11 // pred_region
        _
      $region32: #{tpu_custom_call.1} parent=11 // pred_fallthru
        _
      // Predicated region
      $region33: #{tpu_custom_call.1} parent=11 // pred_check
        %p385 = pneg %p224
      $region34: #{tpu_custom_call.1} parent=11 // pred_check_branch
        %387 = sbr.rel (%p385) target = $region36
      $region35: #{tpu_custom_call.1} parent=11 // pred_region
        _
      $region36: #{tpu_custom_call.1} parent=11 // pred_fallthru
        _
      // Predicated region
      $region37: #{tpu_custom_call.1} parent=11 // pred_check
        %p388 = pneg %p245
      $region38: #{tpu_custom_call.1} parent=11 // pred_check_branch
        %390 = sbr.rel (%p388) target = $region40
      $region39: #{tpu_custom_call.1} parent=11 // pred_region
        _
      $region40: #{tpu_custom_call.1} parent=11 // pred_fallthru
        _
      // Predicated region
      $region41: #{tpu_custom_call.1} parent=11 // pred_check
        %p391 = pneg %p266
      $region42: #{tpu_custom_call.1} parent=11 // pred_check_branch
        %393 = sbr.rel (%p391) target = $region44
      $region43: #{tpu_custom_call.1} parent=11 // pred_region
        _
      $region44: #{tpu_custom_call.1} parent=11 // pred_fallthru
        _
      // Predicated region
      $region45: #{tpu_custom_call.1} parent=11 // pred_check
        %p394 = pneg %p287
      $region46: #{tpu_custom_call.1} parent=11 // pred_check_branch
        %396 = sbr.rel (%p394) target = $region48
      $region47: #{tpu_custom_call.1} parent=11 // pred_region
        _
      $region48: #{tpu_custom_call.1} parent=11 // pred_fallthru
        _
      // Predicated region
      $region49: #{tpu_custom_call.1} parent=11 // pred_check
        %p397 = pneg %p308
      $region50: #{tpu_custom_call.1} parent=11 // pred_check_branch
        %399 = sbr.rel (%p397) target = $region52
      $region51: #{tpu_custom_call.1} parent=11 // pred_region
        _
      $region52: #{tpu_custom_call.1} parent=11 // pred_fallthru
        _
      // Predicated region
      $region53: #{tpu_custom_call.1} parent=11 // pred_check
        %p400 = pneg %p329
      $region54: #{tpu_custom_call.1} parent=11 // pred_check_branch
        %402 = sbr.rel (%p400) target = $region56
      $region55: #{tpu_custom_call.1} parent=11 // pred_region
        _
      $region56: #{tpu_custom_call.1} parent=11 // pred_fallthru
        _
    $region12: #{tpu_custom_call.1} parent=5 // pred_fallthru
      _
    %p403 = scmp.lt.s32.totalorder %s20, 2
    // Predicated region
    $region57: #{tpu_custom_call.1} parent=5 // pred_check
      %p404 = pneg %p403
    $region58: #{tpu_custom_call.1} parent=5 // pred_check_branch
      %406 = sbr.rel (%p404) target = $region60
    $region59: #{tpu_custom_call.1} parent=5 // pred_region
      // Predicated region
      $region61: #{tpu_custom_call.1} parent=59 // pred_check
        %p407 = pneg %p40
      $region62: #{tpu_custom_call.1} parent=59 // pred_check_branch
        %409 = sbr.rel (%p407) target = $region64
      $region63: #{tpu_custom_call.1} parent=59 // pred_region
        %s410 = smul.u32 8, %s20
        %p411 = scmp.lt.s32.totalorder %s410, 15
        %s412 = scalar_select %p411, %s410, 15
        %s413 = smul.addr %s412, 8
        %s414 = scalar_lea.vmem %s0, %s413
        %s415 = smul.u32 8, %s20
      $region64: #{tpu_custom_call.1} parent=59 // pred_fallthru
        _
      // Predicated region
      $region65: #{tpu_custom_call.1} parent=59 // pred_check
        %p416 = pneg %p66
      $region66: #{tpu_custom_call.1} parent=59 // pred_check_branch
        %418 = sbr.rel (%p416) target = $region68
      $region67: #{tpu_custom_call.1} parent=59 // pred_region
        %s419 = smul.u32 8, %s20
        %p420 = scmp.lt.s32.totalorder %s419, 15
        %s421 = scalar_select %p420, %s419, 15
        %s422 = smul.addr %s421, 8
        %s423 = scalar_lea.vmem %s1, %s422
        %s424 = smul.u32 8, %s20
      $region68: #{tpu_custom_call.1} parent=59 // pred_fallthru
        _
      // Predicated region
      $region69: #{tpu_custom_call.1} parent=59 // pred_check
        %p425 = pneg %p92
      $region70: #{tpu_custom_call.1} parent=59 // pred_check_branch
        %427 = sbr.rel (%p425) target = $region72
      $region71: #{tpu_custom_call.1} parent=59 // pred_region
        %s428 = smul.u32 8, %s20
        %p429 = scmp.lt.s32.totalorder %s428, 15
        %s430 = scalar_select %p429, %s428, 15
        %s431 = smul.addr %s430, 8
        %s432 = scalar_lea.vmem %s2, %s431
        %s433 = smul.u32 8, %s20
      $region72: #{tpu_custom_call.1} parent=59 // pred_fallthru
        _
    $region60: #{tpu_custom_call.1} parent=5 // pred_fallthru
      _
    %p434 = scmp.le.s32.totalorder 1, %s20
    %p435 = scmp.lt.s32.totalorder %s20, 3
    %p436 = pnand %p434, %p435
    %p437 = pneg %p436
    // Predicated region
    $region73: #{tpu_custom_call.1} parent=5 // pred_check
      _
    $region74: #{tpu_custom_call.1} parent=5 // pred_check_branch
      %439 = sbr.rel (%p436) target = $region76
    $region75: #{tpu_custom_call.1} parent=5 // pred_region
      %s440 = ssub.s32 %s20, 1
      %s441 = smul.u32 8, %s25
      %p442 = scmp.lt.s32.totalorder %s441, 15
      %s443 = scalar_select %p442, %s441, 15
      %s444 = smul.addr %s443, 8
      %s445 = scalar_lea.vmem %s0, %s444
      %p446 = pneg %p46
      %p447 = pneg %p43
      %s448 = smul.u32 8, %s25
      %p449 = scmp.lt.s32.totalorder %s448, 15
      %s450 = scalar_select %p449, %s448, 15
      %s451 = smul.addr %s450, 8
      %s452 = scalar_lea.vmem %s1, %s451
      %p453 = pneg %p72
      %p454 = pneg %p69
      %s455 = smul.u32 8, %s25
      %p456 = scmp.lt.s32.totalorder %s455, 15
      %s457 = scalar_select %p456, %s455, 15
      %s458 = smul.addr %s457, 8
      %s459 = scalar_lea.vmem %s2, %s458
      %p460 = pneg %p98
      %p461 = pneg %p95
      %p462 = pneg %p119
      %p463 = pneg %p116
      %p464 = pneg %p140
      %p465 = pneg %p137
      %p466 = pneg %p161
      %p467 = pneg %p158
      %p468 = pneg %p182
      %p469 = pneg %p179
      %p470 = pneg %p203
      %p471 = pneg %p200
      %p472 = pneg %p224
      %p473 = pneg %p221
      %p474 = pneg %p245
      %p475 = pneg %p242
      %p476 = pneg %p266
      %p477 = pneg %p263
      %p478 = pneg %p287
      %p479 = pneg %p284
      %p480 = pneg %p308
      %p481 = pneg %p305
      %p482 = pneg %p329
      %p483 = pneg %p326
      %p484 = pneg %p355
      %p485 = pneg %p352
      %s486 = smul.u32 8, %s25
      %p487 = scmp.lt.s32.totalorder %s486, 15
      %s488 = scalar_select %p487, %s486, 15
      %s489 = smul.addr %s488, 8
      %s490 = scalar_lea.vmem %s14, %s489
      %s491 = smul.u32 8, %s25
      %p492 = scmp.lt.s32.totalorder %s491, 15
      %s493 = scalar_select %p492, %s491, 15
      %s494 = smul.addr %s493, 8
      %s495 = scalar_lea.vmem %s0, %s494
      %s496 = smul.u32 8, %s25
      %s497 = smul.u32 8, %s25
      %p498 = scmp.lt.s32.totalorder %s497, 15
      %s499 = scalar_select %p498, %s497, 15
      %s500 = smul.addr %s499, 8
      %s501 = scalar_lea.vmem %s1, %s500
      %s502 = smul.u32 8, %s25
      %s503 = smul.u32 8, %s25
      %p504 = scmp.lt.s32.totalorder %s503, 15
      %s505 = scalar_select %p504, %s503, 15
      %s506 = smul.addr %s505, 8
      %s507 = scalar_lea.vmem %s2, %s506
      %s508 = smul.u32 8, %s25
      %s509 = smul.u32 8, %s25
      %p510 = scmp.lt.s32.totalorder %s509, 15
      %s511 = scalar_select %p510, %s509, 15
      %s512 = smul.addr %s511, 8
      %s513 = scalar_lea.vmem %s14, %s512
      %s514 = smul.u32 8, %s25
      %v515 = vld [vmem:[%s495] sm:$0xff]
      %v516 = vld [vmem:[%s495 + $0x8] sm:$0xff]
      %v517 = vld [vmem:[%s495 + $0x10] sm:$0xff]
      %v518 = vld [vmem:[%s495 + $0x18] sm:$0xff]
      %v519 = vld [vmem:[%s495 + $0x20] sm:$0xff]
      %v520 = vld [vmem:[%s495 + $0x28] sm:$0xff]
      %v521 = vld [vmem:[%s495 + $0x30] sm:$0xff]
      %v522 = vld [vmem:[%s495 + $0x38] sm:$0xff]
      %v523 = vld [vmem:[%s501] sm:$0xff]
      %v524 = vld [vmem:[%s501 + $0x8] sm:$0xff]
      %v525 = vld [vmem:[%s501 + $0x10] sm:$0xff]
      %v526 = vld [vmem:[%s501 + $0x18] sm:$0xff]
      %v527 = vld [vmem:[%s501 + $0x20] sm:$0xff]
      %v528 = vld [vmem:[%s501 + $0x28] sm:$0xff]
      %v529 = vld [vmem:[%s501 + $0x30] sm:$0xff]
      %v530 = vld [vmem:[%s501 + $0x38] sm:$0xff]
      %v531 = vld [vmem:[%s507] sm:$0xff]
      %v532 = vld [vmem:[%s507 + $0x8] sm:$0xff]
      %v533 = vld [vmem:[%s507 + $0x10] sm:$0xff]
      %v534 = vld [vmem:[%s507 + $0x18] sm:$0xff]
      %v535 = vld [vmem:[%s507 + $0x20] sm:$0xff]
      %v536 = vld [vmem:[%s507 + $0x28] sm:$0xff]
      %v537 = vld [vmem:[%s507 + $0x30] sm:$0xff]
      %v538 = vld [vmem:[%s507 + $0x38] sm:$0xff]
      %v539 = vld [vmem:[%s3] sm:$0xff]
      %v540 = vld [vmem:[%s3 + $0x8] sm:$0xff]
      %v541 = vld [vmem:[%s3 + $0x10] sm:$0xff]
      %v542 = vld [vmem:[%s3 + $0x18] sm:$0xff]
      %vm543 = vcmask 261120
      %v545 = vsel %vm543, %v515, 0
      %v548 = vsel %vm543, %v516, 0
      %v551 = vsel %vm543, %v517, 0
      %v554 = vsel %vm543, %v518, 0
      %v557 = vsel %vm543, %v519, 0
      %v560 = vsel %vm543, %v520, 0
      %v563 = vsel %vm543, %v521, 0
      %v566 = vsel %vm543, %v522, 0
      %568 = vmatpush.msra.mxu0 0.0
      %569 = vmatpush.msra.mxu0 0.0
      %570 = vmatpush.msra.mxu0 0.0
      %571 = vmatpush.msra.mxu0 0.0
      %572 = vmatpush.msra.mxu0 0.0
      %573 = vmatpush.msra.mxu0 0.0
      %574 = vmatpush.msra.mxu0 0.0
      %575 = vmatpush.msra.mxu0 0.0
      %576 = vmatpush.msra.mxu0 0.0
      %577 = vmatpush.msra.mxu0 0.0
      %578 = vmatpush.msra.mxu0 0.0
      %579 = vmatpush.msra.mxu0 0.0
      %580 = vmatpush.msra.mxu0 %v542
      %581 = vmatpush.msra.mxu0 %v541
      %582 = vmatpush.msra.mxu0 %v540
      %583 = vmatpush.msra.mxu0 %v539
      %584 = vmatmul.f32.gmra.mxu0 %v545
      %v585 = vpop.f32.mrf.mxu0
      %v586 = vadd.f32 0.0, %v585
      %587 = vmatmul.f32.gmra.mxu0 %v548
      %v588 = vpop.f32.mrf.mxu0
      %v589 = vadd.f32 0.0, %v588
      %590 = vmatmul.f32.gmra.mxu0 %v551
      %v591 = vpop.f32.mrf.mxu0
      %v592 = vadd.f32 0.0, %v591
      %593 = vmatmul.f32.gmra.mxu0 %v554
      %v594 = vpop.f32.mrf.mxu0
      %v595 = vadd.f32 0.0, %v594
      %596 = vmatmul.f32.gmra.mxu0 %v557
      %v597 = vpop.f32.mrf.mxu0
      %v598 = vadd.f32 0.0, %v597
      %599 = vmatmul.f32.gmra.mxu0 %v560
      %v600 = vpop.f32.mrf.mxu0
      %v601 = vadd.f32 0.0, %v600
      %602 = vmatmul.f32.gmra.mxu0 %v563
      %v603 = vpop.f32.mrf.mxu0
      %v604 = vadd.f32 0.0, %v603
      %605 = vmatmul.f32.gmra.mxu0 %v566
      %v606 = vpop.f32.mrf.mxu0
      %v607 = vadd.f32 0.0, %v606
      %608 = vdwg.mxu0
      %v609 = vld [vmem:[%s4] sm:$0xff]
      %v610 = vld [vmem:[%s4 + $0x8] sm:$0xff]
      %v611 = vld [vmem:[%s4 + $0x10] sm:$0xff]
      %v612 = vld [vmem:[%s4 + $0x18] sm:$0xff]
      %v614 = vsel %vm543, %v586, 0
      %v617 = vsel %vm543, %v589, 0
      %v620 = vsel %vm543, %v592, 0
      %v623 = vsel %vm543, %v595, 0
      %v626 = vsel %vm543, %v598, 0
      %v629 = vsel %vm543, %v601, 0
      %v632 = vsel %vm543, %v604, 0
      %v635 = vsel %vm543, %v607, 0
      %637 = vmatpush.msra.mxu0 0.0
      %638 = vmatpush.msra.mxu0 0.0
      %639 = vmatpush.msra.mxu0 0.0
      %640 = vmatpush.msra.mxu0 0.0
      %641 = vmatpush.msra.mxu0 0.0
      %642 = vmatpush.msra.mxu0 0.0
      %643 = vmatpush.msra.mxu0 0.0
      %644 = vmatpush.msra.mxu0 0.0
      %645 = vmatpush.msra.mxu0 0.0
      %646 = vmatpush.msra.mxu0 0.0
      %647 = vmatpush.msra.mxu0 0.0
      %648 = vmatpush.msra.mxu0 0.0
      %649 = vmatpush.msra.mxu0 %v612
      %650 = vmatpush.msra.mxu0 %v611
      %651 = vmatpush.msra.mxu0 %v610
      %652 = vmatpush.msra.mxu0 %v609
      %653 = vmatmul.f32.gmra.mxu0 %v614
      %v654 = vpop.f32.mrf.mxu0
      %v655 = vadd.f32 0.0, %v654
      %656 = vmatmul.f32.gmra.mxu0 %v617
      %v657 = vpop.f32.mrf.mxu0
      %v658 = vadd.f32 0.0, %v657
      %659 = vmatmul.f32.gmra.mxu0 %v620
      %v660 = vpop.f32.mrf.mxu0
      %v661 = vadd.f32 0.0, %v660
      %662 = vmatmul.f32.gmra.mxu0 %v623
      %v663 = vpop.f32.mrf.mxu0
      %v664 = vadd.f32 0.0, %v663
      %665 = vmatmul.f32.gmra.mxu0 %v626
      %v666 = vpop.f32.mrf.mxu0
      %v667 = vadd.f32 0.0, %v666
      %668 = vmatmul.f32.gmra.mxu0 %v629
      %v669 = vpop.f32.mrf.mxu0
      %v670 = vadd.f32 0.0, %v669
      %671 = vmatmul.f32.gmra.mxu0 %v632
      %v672 = vpop.f32.mrf.mxu0
      %v673 = vadd.f32 0.0, %v672
      %674 = vmatmul.f32.gmra.mxu0 %v635
      %v675 = vpop.f32.mrf.mxu0
      %v676 = vadd.f32 0.0, %v675
      %677 = vdwg.mxu0
      %v678 = vld [vmem:[%s5] sm:$0xff]
      %v679 = vld [vmem:[%s5 + $0x8] sm:$0xff]
      %v680 = vld [vmem:[%s5 + $0x10] sm:$0xff]
      %v681 = vld [vmem:[%s5 + $0x18] sm:$0xff]
      %v682 = vld [vmem:[%s5 + $0x20] sm:$0xff]
      %v683 = vld [vmem:[%s5 + $0x28] sm:$0xff]
      %v684 = vld [vmem:[%s5 + $0x30] sm:$0xff]
      %v685 = vld [vmem:[%s5 + $0x38] sm:$0xff]
      %v686 = vld [vmem:[%s5 + $0x40] sm:$0xff]
      %v687 = vld [vmem:[%s5 + $0x48] sm:$0xff]
      %v688 = vld [vmem:[%s5 + $0x50] sm:$0xff]
      %v689 = vld [vmem:[%s5 + $0x58] sm:$0xff]
      %v690 = vld [vmem:[%s5 + $0x60] sm:$0xff]
      %v691 = vld [vmem:[%s5 + $0x68] sm:$0xff]
      %v692 = vld [vmem:[%s5 + $0x70] sm:$0xff]
      %v693 = vld [vmem:[%s5 + $0x78] sm:$0xff]
      %694 = vmatpush.msra.mxu0 %v693
      %695 = vmatpush.msra.mxu0 %v692
      %696 = vmatpush.msra.mxu0 %v691
      %697 = vmatpush.msra.mxu0 %v690
      %698 = vmatpush.msra.mxu0 %v689
      %699 = vmatpush.msra.mxu0 %v688
      %700 = vmatpush.msra.mxu0 %v687
      %701 = vmatpush.msra.mxu0 %v686
      %702 = vmatpush.msra.mxu0 %v685
      %703 = vmatpush.msra.mxu0 %v684
      %704 = vmatpush.msra.mxu0 %v683
      %705 = vmatpush.msra.mxu0 %v682
      %706 = vmatpush.msra.mxu0 %v681
      %707 = vmatpush.msra.mxu0 %v680
      %708 = vmatpush.msra.mxu0 %v679
      %709 = vmatpush.msra.mxu0 %v678
      %710 = vmatmul.f32.gmra.mxu0 %v523
      %v711 = vpop.f32.mrf.mxu0
      %v712 = vadd.f32 0.0, %v711
      %713 = vmatmul.f32.gmra.mxu0 %v524
      %v714 = vpop.f32.mrf.mxu0
      %v715 = vadd.f32 0.0, %v714
      %716 = vmatmul.f32.gmra.mxu0 %v525
      %v717 = vpop.f32.mrf.mxu0
      %v718 = vadd.f32 0.0, %v717
      %719 = vmatmul.f32.gmra.mxu0 %v526
      %v720 = vpop.f32.mrf.mxu0
      %v721 = vadd.f32 0.0, %v720
      %722 = vmatmul.f32.gmra.mxu0 %v527
      %v723 = vpop.f32.mrf.mxu0
      %v724 = vadd.f32 0.0, %v723
      %725 = vmatmul.f32.gmra.mxu0 %v528
      %v726 = vpop.f32.mrf.mxu0
      %v727 = vadd.f32 0.0, %v726
      %728 = vmatmul.f32.gmra.mxu0 %v529
      %v729 = vpop.f32.mrf.mxu0
      %v730 = vadd.f32 0.0, %v729
      %731 = vmatmul.f32.gmra.mxu0 %v530
      %v732 = vpop.f32.mrf.mxu0
      %v733 = vadd.f32 0.0, %v732
      %734 = vdwg.mxu0
      %v735 = vld [vmem:[%s6] sm:$0xf]
      %744 = vrot.lane.b32.xlu0 %v655, 64
      %v745 = vpop.permute.xlu0 %744
      %746 = vrot.lane.b32.xlu0 %v658, 64
      %v747 = vpop.permute.xlu0 %746
      %748 = vrot.lane.b32.xlu0 %v661, 64
      %v749 = vpop.permute.xlu0 %748
      %750 = vrot.lane.b32.xlu0 %v664, 64
      %v751 = vpop.permute.xlu0 %750
      %752 = vrot.lane.b32.xlu0 %v667, 64
      %v753 = vpop.permute.xlu0 %752
      %754 = vrot.lane.b32.xlu0 %v670, 64
      %v755 = vpop.permute.xlu0 %754
      %756 = vrot.lane.b32.xlu0 %v673, 64
      %v757 = vpop.permute.xlu0 %756
      %758 = vrot.lane.b32.xlu0 %v676, 64
      %v759 = vpop.permute.xlu0 %758
      %vm760 = vcmask 31744
      %v761 = vsel %vm760, %v745, 0
      %v763 = vsel %vm760, %v747, 0
      %v765 = vsel %vm760, %v749, 0
      %v767 = vsel %vm760, %v751, 0
      %v769 = vsel %vm760, %v753, 0
      %v771 = vsel %vm760, %v755, 0
      %v773 = vsel %vm760, %v757, 0
      %v775 = vsel %vm760, %v759, 0
      %vm777 = vcmask 1043456
      %v779 = vsel %vm777, %v735, 0
      %781 = vmatpush.msra.mxu0 0.0
      %782 = vmatpush.msra.mxu0 0.0
      %783 = vmatpush.msra.mxu0 0.0
      %784 = vmatpush.msra.mxu0 0.0
      %785 = vmatpush.msra.mxu0 0.0
      %786 = vmatpush.msra.mxu0 0.0
      %787 = vmatpush.msra.mxu0 0.0
      %788 = vmatpush.msra.mxu0 0.0
      %789 = vmatpush.msra.mxu0 0.0
      %790 = vmatpush.msra.mxu0 0.0
      %791 = vmatpush.msra.mxu0 0.0
      %792 = vmatpush.msra.mxu0 0.0
      %793 = vmatpush.msra.mxu0 0.0
      %794 = vmatpush.msra.mxu0 0.0
      %795 = vmatpush.msra.mxu0 0.0
      %796 = vmatpush.msra.mxu0 %v779
      %797 = vmatmul.f32.gmra.mxu0 %v761
      %v798 = vpop.f32.mrf.mxu0
      %v799 = vadd.f32 0.0, %v798
      %800 = vmatmul.f32.gmra.mxu0 %v763
      %v801 = vpop.f32.mrf.mxu0
      %v802 = vadd.f32 0.0, %v801
      %803 = vmatmul.f32.gmra.mxu0 %v765
      %v804 = vpop.f32.mrf.mxu0
      %v805 = vadd.f32 0.0, %v804
      %806 = vmatmul.f32.gmra.mxu0 %v767
      %v807 = vpop.f32.mrf.mxu0
      %v808 = vadd.f32 0.0, %v807
      %809 = vmatmul.f32.gmra.mxu0 %v769
      %v810 = vpop.f32.mrf.mxu0
      %v811 = vadd.f32 0.0, %v810
      %812 = vmatmul.f32.gmra.mxu0 %v771
      %v813 = vpop.f32.mrf.mxu0
      %v814 = vadd.f32 0.0, %v813
      %815 = vmatmul.f32.gmra.mxu0 %v773
      %v816 = vpop.f32.mrf.mxu0
      %v817 = vadd.f32 0.0, %v816
      %818 = vmatmul.f32.gmra.mxu0 %v775
      %v819 = vpop.f32.mrf.mxu0
      %v820 = vadd.f32 0.0, %v819
      %821 = vdwg.mxu0
      %v822 = vld [vmem:[%s7] sm:$0xff]
      %v823 = vld [vmem:[%s7 + $0x8] sm:$0xff]
      %v824 = vld [vmem:[%s7 + $0x10] sm:$0xff]
      %v825 = vld [vmem:[%s7 + $0x18] sm:$0xff]
      %v826 = vld [vmem:[%s7 + $0x20] sm:$0xff]
      %v827 = vld [vmem:[%s7 + $0x28] sm:$0xff]
      %v828 = vld [vmem:[%s7 + $0x30] sm:$0xff]
      %v829 = vld [vmem:[%s7 + $0x38] sm:$0xff]
      %v830 = vmul.f32 %v799, %v822
      %v831 = vmul.f32 %v802, %v823
      %v832 = vmul.f32 %v805, %v824
      %v833 = vmul.f32 %v808, %v825
      %v834 = vmul.f32 %v811, %v826
      %v835 = vmul.f32 %v814, %v827
      %v836 = vmul.f32 %v817, %v828
      %v837 = vmul.f32 %v820, %v829
      %v838 = vld [vmem:[%s8] sm:$0xff]
      %v839 = vld [vmem:[%s8 + $0x8] sm:$0xff]
      %v840 = vld [vmem:[%s8 + $0x10] sm:$0xff]
      %v841 = vld [vmem:[%s8 + $0x18] sm:$0xff]
      %v842 = vld [vmem:[%s8 + $0x20] sm:$0xff]
      %v843 = vld [vmem:[%s8 + $0x28] sm:$0xff]
      %v844 = vld [vmem:[%s8 + $0x30] sm:$0xff]
      %v845 = vld [vmem:[%s8 + $0x38] sm:$0xff]
      %vm846 = vcmask 523264
      %v848 = vsel %vm846, %v838, 0
      %v851 = vsel %vm846, %v839, 0
      %v854 = vsel %vm846, %v840, 0
      %v857 = vsel %vm846, %v841, 0
      %v860 = vsel %vm846, %v842, 0
      %v863 = vsel %vm846, %v843, 0
      %v866 = vsel %vm846, %v844, 0
      %v869 = vsel %vm846, %v845, 0
      %871 = vmatpush.msra.mxu0 0.0
      %872 = vmatpush.msra.mxu0 0.0
      %873 = vmatpush.msra.mxu0 0.0
      %874 = vmatpush.msra.mxu0 0.0
      %875 = vmatpush.msra.mxu0 0.0
      %876 = vmatpush.msra.mxu0 0.0
      %877 = vmatpush.msra.mxu0 0.0
      %878 = vmatpush.msra.mxu0 0.0
      %879 = vmatpush.msra.mxu0 %v837
      %880 = vmatpush.msra.mxu0 %v836
      %881 = vmatpush.msra.mxu0 %v835
      %882 = vmatpush.msra.mxu0 %v834
      %883 = vmatpush.msra.mxu0 %v833
      %884 = vmatpush.msra.mxu0 %v832
      %885 = vmatpush.msra.mxu0 %v831
      %886 = vmatpush.msra.mxu0 %v830
      %887 = vmatmul.f32.gmra.mxu0 %v848
      %v888 = vpop.f32.mrf.mxu0
      %v889 = vadd.f32 0.0, %v888
      %890 = vmatmul.f32.gmra.mxu0 %v851
      %v891 = vpop.f32.mrf.mxu0
      %v892 = vadd.f32 0.0, %v891
      %893 = vmatmul.f32.gmra.mxu0 %v854
      %v894 = vpop.f32.mrf.mxu0
      %v895 = vadd.f32 0.0, %v894
      %896 = vmatmul.f32.gmra.mxu0 %v857
      %v897 = vpop.f32.mrf.mxu0
      %v898 = vadd.f32 0.0, %v897
      %899 = vmatmul.f32.gmra.mxu0 %v860
      %v900 = vpop.f32.mrf.mxu0
      %v901 = vadd.f32 0.0, %v900
      %902 = vmatmul.f32.gmra.mxu0 %v863
      %v903 = vpop.f32.mrf.mxu0
      %v904 = vadd.f32 0.0, %v903
      %905 = vmatmul.f32.gmra.mxu0 %v866
      %v906 = vpop.f32.mrf.mxu0
      %v907 = vadd.f32 0.0, %v906
      %908 = vmatmul.f32.gmra.mxu0 %v869
      %v909 = vpop.f32.mrf.mxu0
      %v910 = vadd.f32 0.0, %v909
      %911 = vdwg.mxu0
      %v912 = vadd.f32 %v655, %v712
      %v913 = vadd.f32 %v658, %v715
      %v914 = vadd.f32 %v661, %v718
      %v915 = vadd.f32 %v664, %v721
      %v916 = vadd.f32 %v667, %v724
      %v917 = vadd.f32 %v670, %v727
      %v918 = vadd.f32 %v673, %v730
      %v919 = vadd.f32 %v676, %v733
      %v920 = vadd.f32 %v912, %v889
      %v921 = vadd.f32 %v913, %v892
      %v922 = vadd.f32 %v914, %v895
      %v923 = vadd.f32 %v915, %v898
      %v924 = vadd.f32 %v916, %v901
      %v925 = vadd.f32 %v917, %v904
      %v926 = vadd.f32 %v918, %v907
      %v927 = vadd.f32 %v919, %v910
      %vm928 = vcmp.gt.f32.partialorder %v920, 0.0
      %vm929 = vcmp.gt.f32.partialorder %v921, 0.0
      %vm930 = vcmp.gt.f32.partialorder %v922, 0.0
      %vm931 = vcmp.gt.f32.partialorder %v923, 0.0
      %vm932 = vcmp.gt.f32.partialorder %v924, 0.0
      %vm933 = vcmp.gt.f32.partialorder %v925, 0.0
      %vm934 = vcmp.gt.f32.partialorder %v926, 0.0
      %vm935 = vcmp.gt.f32.partialorder %v927, 0.0
      %v936 = vmul.f32 %v920, 0.2
      %v937 = vmul.f32 %v921, 0.2
      %v938 = vmul.f32 %v922, 0.2
      %v939 = vmul.f32 %v923, 0.2
      %v940 = vmul.f32 %v924, 0.2
      %v941 = vmul.f32 %v925, 0.2
      %v942 = vmul.f32 %v926, 0.2
      %v943 = vmul.f32 %v927, 0.2
      %v944 = vsel %vm928, %v920, %v936
      %v945 = vsel %vm929, %v921, %v937
      %v946 = vsel %vm930, %v922, %v938
      %v947 = vsel %vm931, %v923, %v939
      %v948 = vsel %vm932, %v924, %v940
      %v949 = vsel %vm933, %v925, %v941
      %v950 = vsel %vm934, %v926, %v942
      %v951 = vsel %vm935, %v927, %v943
      %vm952 = vcmp.gt.f32.partialorder %v531, 0.0
      %vm953 = vcmp.gt.f32.partialorder %v532, 0.0
      %vm954 = vcmp.gt.f32.partialorder %v533, 0.0
      %vm955 = vcmp.gt.f32.partialorder %v534, 0.0
      %vm956 = vcmp.gt.f32.partialorder %v535, 0.0
      %vm957 = vcmp.gt.f32.partialorder %v536, 0.0
      %vm958 = vcmp.gt.f32.partialorder %v537, 0.0
      %vm959 = vcmp.gt.f32.partialorder %v538, 0.0
      %v960 = vsel %vm952, %v944, -1e+30
      %v961 = vsel %vm953, %v945, -1e+30
      %v962 = vsel %vm954, %v946, -1e+30
      %v963 = vsel %vm955, %v947, -1e+30
      %v964 = vsel %vm956, %v948, -1e+30
      %v965 = vsel %vm957, %v949, -1e+30
      %v966 = vsel %vm958, %v950, -1e+30
      %v967 = vsel %vm959, %v951, -1e+30
      %v968 = vsel %vm846, %v960, -inf
      %969 = vmax.xlane.f32.xlu0 %v968
      %v970 = vpop.xlane.xlu0 %969
      %v971 = vsel %vm846, %v961, -inf
      %972 = vmax.xlane.f32.xlu0 %v971
      %v973 = vpop.xlane.xlu0 %972
      %v974 = vsel %vm846, %v962, -inf
      %975 = vmax.xlane.f32.xlu0 %v974
      %v976 = vpop.xlane.xlu0 %975
      %v977 = vsel %vm846, %v963, -inf
      %978 = vmax.xlane.f32.xlu0 %v977
      %v979 = vpop.xlane.xlu0 %978
      %v980 = vsel %vm846, %v964, -inf
      %981 = vmax.xlane.f32.xlu0 %v980
      %v982 = vpop.xlane.xlu0 %981
      %v983 = vsel %vm846, %v965, -inf
      %984 = vmax.xlane.f32.xlu0 %v983
      %v985 = vpop.xlane.xlu0 %984
      %v986 = vsel %vm846, %v966, -inf
      %987 = vmax.xlane.f32.xlu0 %v986
      %v988 = vpop.xlane.xlu0 %987
      %v989 = vsel %vm846, %v967, -inf
      %990 = vmax.xlane.f32.xlu0 %v989
      %v991 = vpop.xlane.xlu0 %990
      %v992 = vsub.f32 %v960, %v970
      %v993 = vsub.f32 %v961, %v973
      %v994 = vsub.f32 %v962, %v976
      %v995 = vsub.f32 %v963, %v979
      %v996 = vsub.f32 %v964, %v982
      %v997 = vsub.f32 %v965, %v985
      %v998 = vsub.f32 %v966, %v988
      %v999 = vsub.f32 %v967, %v991
      %v1000 = vmul.f32 %v992, 1.442695
      %v1001 = vpow.pop %v1000
      %v1002 = vmul.f32 %v993, 1.442695
      %v1003 = vpow.pop %v1002
      %v1004 = vmul.f32 %v994, 1.442695
      %v1005 = vpow.pop %v1004
      %v1006 = vmul.f32 %v995, 1.442695
      %v1007 = vpow.pop %v1006
      %v1008 = vmul.f32 %v996, 1.442695
      %v1009 = vpow.pop %v1008
      %v1010 = vmul.f32 %v997, 1.442695
      %v1011 = vpow.pop %v1010
      %v1012 = vmul.f32 %v998, 1.442695
      %v1013 = vpow.pop %v1012
      %v1014 = vmul.f32 %v999, 1.442695
      %v1015 = vpow.pop %v1014
      %v1016 = vmul.f32 %v1001, %v531
      %v1017 = vmul.f32 %v1003, %v532
      %v1018 = vmul.f32 %v1005, %v533
      %v1019 = vmul.f32 %v1007, %v534
      %v1020 = vmul.f32 %v1009, %v535
      %v1021 = vmul.f32 %v1011, %v536
      %v1022 = vmul.f32 %v1013, %v537
      %v1023 = vmul.f32 %v1015, %v538
      %v1024 = vld [vmem:[%s9] sm:$0xff]
      %v1025 = vld [vmem:[%s9 + $0x8] sm:$0xff]
      %v1026 = vld [vmem:[%s9 + $0x10] sm:$0xff]
      %v1027 = vld [vmem:[%s9 + $0x18] sm:$0xff]
      %v1028 = vld [vmem:[%s9 + $0x20] sm:$0xff]
      %v1029 = vld [vmem:[%s9 + $0x28] sm:$0xff]
      %v1030 = vld [vmem:[%s9 + $0x30] sm:$0xff]
      %v1031 = vld [vmem:[%s9 + $0x38] sm:$0xff]
      %v1033 = vsel %vm846, %v1016, 0
      %v1036 = vsel %vm846, %v1017, 0
      %v1039 = vsel %vm846, %v1018, 0
      %v1042 = vsel %vm846, %v1019, 0
      %v1045 = vsel %vm846, %v1020, 0
      %v1048 = vsel %vm846, %v1021, 0
      %v1051 = vsel %vm846, %v1022, 0
      %v1054 = vsel %vm846, %v1023, 0
      %1056 = vmatpush.msra.mxu0 0.0
      %1057 = vmatpush.msra.mxu0 0.0
      %1058 = vmatpush.msra.mxu0 0.0
      %1059 = vmatpush.msra.mxu0 0.0
      %1060 = vmatpush.msra.mxu0 0.0
      %1061 = vmatpush.msra.mxu0 0.0
      %1062 = vmatpush.msra.mxu0 0.0
      %1063 = vmatpush.msra.mxu0 0.0
      %1064 = vmatpush.msra.mxu0 %v1031
      %1065 = vmatpush.msra.mxu0 %v1030
      %1066 = vmatpush.msra.mxu0 %v1029
      %1067 = vmatpush.msra.mxu0 %v1028
      %1068 = vmatpush.msra.mxu0 %v1027
      %1069 = vmatpush.msra.mxu0 %v1026
      %1070 = vmatpush.msra.mxu0 %v1025
      %1071 = vmatpush.msra.mxu0 %v1024
      %1072 = vmatmul.f32.gmra.mxu0 %v1033
      %v1073 = vpop.f32.mrf.mxu0
      %v1074 = vadd.f32 0.0, %v1073
      %1075 = vmatmul.f32.gmra.mxu0 %v1036
      %v1076 = vpop.f32.mrf.mxu0
      %v1077 = vadd.f32 0.0, %v1076
      %1078 = vmatmul.f32.gmra.mxu0 %v1039
      %v1079 = vpop.f32.mrf.mxu0
      %v1080 = vadd.f32 0.0, %v1079
      %1081 = vmatmul.f32.gmra.mxu0 %v1042
      %v1082 = vpop.f32.mrf.mxu0
      %v1083 = vadd.f32 0.0, %v1082
      %1084 = vmatmul.f32.gmra.mxu0 %v1045
      %v1085 = vpop.f32.mrf.mxu0
      %v1086 = vadd.f32 0.0, %v1085
      %1087 = vmatmul.f32.gmra.mxu0 %v1048
      %v1088 = vpop.f32.mrf.mxu0
      %v1089 = vadd.f32 0.0, %v1088
      %1090 = vmatmul.f32.gmra.mxu0 %v1051
      %v1091 = vpop.f32.mrf.mxu0
      %v1092 = vadd.f32 0.0, %v1091
      %1093 = vmatmul.f32.gmra.mxu0 %v1054
      %v1094 = vpop.f32.mrf.mxu0
      %v1095 = vadd.f32 0.0, %v1094
      %1096 = vdwg.mxu0
      %v1097 = vmax.f32 %v1074, 1e-20
      %v1098 = vmax.f32 %v1077, 1e-20
      %v1099 = vmax.f32 %v1080, 1e-20
      %v1100 = vmax.f32 %v1083, 1e-20
      %v1101 = vmax.f32 %v1086, 1e-20
      %v1102 = vmax.f32 %v1089, 1e-20
      %v1103 = vmax.f32 %v1092, 1e-20
      %v1104 = vmax.f32 %v1095, 1e-20
      %v1105 = vrcp.pop %v1097
      %v1106 = vmul.f32 %v1097, %v1105
      %v1107 = vsub.f32 1.0, %v1106
      %v1108 = vmul.f32 %v1105, %v1107
      %v1109 = vadd.f32 %v1105, %v1108
      %vm1110 = vweird.f32 %v1097
      %vm1111 = vweird.f32 %v1105
      %vm1112 = vmor %vm1110, %vm1111
      %v1113 = vsel %vm1112, %v1105, %v1109
      %v1114 = vand.u32 2147483647, %v1097
      %vm1115 = vcmp.eq.f32.partialorder %v1114, 8.507059e+37
      %v1116 = vand.u32 %v1097, 2147483648
      %v1117 = vor.u32 1.1754944e-38, %v1116
      %v1118 = vsel %vm1115, %v1117, %v1113
      %v1119 = vrcp.pop %v1098
      %v1120 = vmul.f32 %v1098, %v1119
      %v1121 = vsub.f32 1.0, %v1120
      %v1122 = vmul.f32 %v1119, %v1121
      %v1123 = vadd.f32 %v1119, %v1122
      %vm1124 = vweird.f32 %v1098
      %vm1125 = vweird.f32 %v1119
      %vm1126 = vmor %vm1124, %vm1125
      %v1127 = vsel %vm1126, %v1119, %v1123
      %v1128 = vand.u32 2147483647, %v1098
      %vm1129 = vcmp.eq.f32.partialorder %v1128, 8.507059e+37
      %v1130 = vand.u32 %v1098, 2147483648
      %v1131 = vor.u32 1.1754944e-38, %v1130
      %v1132 = vsel %vm1129, %v1131, %v1127
      %v1133 = vrcp.pop %v1099
      %v1134 = vmul.f32 %v1099, %v1133
      %v1135 = vsub.f32 1.0, %v1134
      %v1136 = vmul.f32 %v1133, %v1135
      %v1137 = vadd.f32 %v1133, %v1136
      %vm1138 = vweird.f32 %v1099
      %vm1139 = vweird.f32 %v1133
      %vm1140 = vmor %vm1138, %vm1139
      %v1141 = vsel %vm1140, %v1133, %v1137
      %v1142 = vand.u32 2147483647, %v1099
      %vm1143 = vcmp.eq.f32.partialorder %v1142, 8.507059e+37
      %v1144 = vand.u32 %v1099, 2147483648
      %v1145 = vor.u32 1.1754944e-38, %v1144
      %v1146 = vsel %vm1143, %v1145, %v1141
      %v1147 = vrcp.pop %v1100
      %v1148 = vmul.f32 %v1100, %v1147
      %v1149 = vsub.f32 1.0, %v1148
      %v1150 = vmul.f32 %v1147, %v1149
      %v1151 = vadd.f32 %v1147, %v1150
      %vm1152 = vweird.f32 %v1100
      %vm1153 = vweird.f32 %v1147
      %vm1154 = vmor %vm1152, %vm1153
      %v1155 = vsel %vm1154, %v1147, %v1151
      %v1156 = vand.u32 2147483647, %v1100
      %vm1157 = vcmp.eq.f32.partialorder %v1156, 8.507059e+37
      %v1158 = vand.u32 %v1100, 2147483648
      %v1159 = vor.u32 1.1754944e-38, %v1158
      %v1160 = vsel %vm1157, %v1159, %v1155
      %v1161 = vrcp.pop %v1101
      %v1162 = vmul.f32 %v1101, %v1161
      %v1163 = vsub.f32 1.0, %v1162
      %v1164 = vmul.f32 %v1161, %v1163
      %v1165 = vadd.f32 %v1161, %v1164
      %vm1166 = vweird.f32 %v1101
      %vm1167 = vweird.f32 %v1161
      %vm1168 = vmor %vm1166, %vm1167
      %v1169 = vsel %vm1168, %v1161, %v1165
      %v1170 = vand.u32 2147483647, %v1101
      %vm1171 = vcmp.eq.f32.partialorder %v1170, 8.507059e+37
      %v1172 = vand.u32 %v1101, 2147483648
      %v1173 = vor.u32 1.1754944e-38, %v1172
      %v1174 = vsel %vm1171, %v1173, %v1169
      %v1175 = vrcp.pop %v1102
      %v1176 = vmul.f32 %v1102, %v1175
      %v1177 = vsub.f32 1.0, %v1176
      %v1178 = vmul.f32 %v1175, %v1177
      %v1179 = vadd.f32 %v1175, %v1178
      %vm1180 = vweird.f32 %v1102
      %vm1181 = vweird.f32 %v1175
      %vm1182 = vmor %vm1180, %vm1181
      %v1183 = vsel %vm1182, %v1175, %v1179
      %v1184 = vand.u32 2147483647, %v1102
      %vm1185 = vcmp.eq.f32.partialorder %v1184, 8.507059e+37
      %v1186 = vand.u32 %v1102, 2147483648
      %v1187 = vor.u32 1.1754944e-38, %v1186
      %v1188 = vsel %vm1185, %v1187, %v1183
      %v1189 = vrcp.pop %v1103
      %v1190 = vmul.f32 %v1103, %v1189
      %v1191 = vsub.f32 1.0, %v1190
      %v1192 = vmul.f32 %v1189, %v1191
      %v1193 = vadd.f32 %v1189, %v1192
      %vm1194 = vweird.f32 %v1103
      %vm1195 = vweird.f32 %v1189
      %vm1196 = vmor %vm1194, %vm1195
      %v1197 = vsel %vm1196, %v1189, %v1193
      %v1198 = vand.u32 2147483647, %v1103
      %vm1199 = vcmp.eq.f32.partialorder %v1198, 8.507059e+37
      %v1200 = vand.u32 %v1103, 2147483648
      %v1201 = vor.u32 1.1754944e-38, %v1200
      %v1202 = vsel %vm1199, %v1201, %v1197
      %v1203 = vrcp.pop %v1104
      %v1204 = vmul.f32 %v1104, %v1203
      %v1205 = vsub.f32 1.0, %v1204
      %v1206 = vmul.f32 %v1203, %v1205
      %v1207 = vadd.f32 %v1203, %v1206
      %vm1208 = vweird.f32 %v1104
      %vm1209 = vweird.f32 %v1203
      %vm1210 = vmor %vm1208, %vm1209
      %v1211 = vsel %vm1210, %v1203, %v1207
      %v1212 = vand.u32 2147483647, %v1104
      %vm1213 = vcmp.eq.f32.partialorder %v1212, 8.507059e+37
      %v1214 = vand.u32 %v1104, 2147483648
      %v1215 = vor.u32 1.1754944e-38, %v1214
      %v1216 = vsel %vm1213, %v1215, %v1211
      %v1217 = vmul.f32 %v1016, %v1118
      %v1218 = vmul.f32 %v1017, %v1132
      %v1219 = vmul.f32 %v1018, %v1146
      %v1220 = vmul.f32 %v1019, %v1160
      %v1221 = vmul.f32 %v1020, %v1174
      %v1222 = vmul.f32 %v1021, %v1188
      %v1223 = vmul.f32 %v1022, %v1202
      %v1224 = vmul.f32 %v1023, %v1216
      %1233 = vrot.lane.b32.xlu0 %v1217, 64
      %v1234 = vpop.permute.xlu0 %1233
      %1235 = vrot.lane.b32.xlu0 %v1218, 64
      %v1236 = vpop.permute.xlu0 %1235
      %1237 = vrot.lane.b32.xlu0 %v1219, 64
      %v1238 = vpop.permute.xlu0 %1237
      %1239 = vrot.lane.b32.xlu0 %v1220, 64
      %v1240 = vpop.permute.xlu0 %1239
      %1241 = vrot.lane.b32.xlu0 %v1221, 64
      %v1242 = vpop.permute.xlu0 %1241
      %1243 = vrot.lane.b32.xlu0 %v1222, 64
      %v1244 = vpop.permute.xlu0 %1243
      %1245 = vrot.lane.b32.xlu0 %v1223, 64
      %v1246 = vpop.permute.xlu0 %1245
      %1247 = vrot.lane.b32.xlu0 %v1224, 64
      %v1248 = vpop.permute.xlu0 %1247
      %v1257 = vsel %vm846, %v1217, %v1234
      %v1258 = vsel %vm846, %v1218, %v1236
      %v1259 = vsel %vm846, %v1219, %v1238
      %v1260 = vsel %vm846, %v1220, %v1240
      %v1261 = vsel %vm846, %v1221, %v1242
      %v1262 = vsel %vm846, %v1222, %v1244
      %v1263 = vsel %vm846, %v1223, %v1246
      %v1264 = vsel %vm846, %v1224, %v1248
      %v1265 = vld [vmem:[%s10] sm:$0xff]
      %v1266 = vld [vmem:[%s10 + $0x8] sm:$0xff]
      %v1267 = vld [vmem:[%s10 + $0x10] sm:$0xff]
      %v1268 = vld [vmem:[%s10 + $0x18] sm:$0xff]
      %v1269 = vld [vmem:[%s10 + $0x20] sm:$0xff]
      %v1270 = vld [vmem:[%s10 + $0x28] sm:$0xff]
      %v1271 = vld [vmem:[%s10 + $0x30] sm:$0xff]
      %v1272 = vld [vmem:[%s10 + $0x38] sm:$0xff]
      %v1273 = vld [vmem:[%s10 + $0x40] sm:$0xff]
      %v1274 = vld [vmem:[%s10 + $0x48] sm:$0xff]
      %v1275 = vld [vmem:[%s10 + $0x50] sm:$0xff]
      %v1276 = vld [vmem:[%s10 + $0x58] sm:$0xff]
      %v1277 = vld [vmem:[%s10 + $0x60] sm:$0xff]
      %v1278 = vld [vmem:[%s10 + $0x68] sm:$0xff]
      %v1279 = vld [vmem:[%s10 + $0x70] sm:$0xff]
      %v1280 = vld [vmem:[%s10 + $0x78] sm:$0xff]
      %v1281 = vmul.f32 %v1257, %v1265
      %v1282 = vmul.f32 %v1257, %v1266
      %v1283 = vmul.f32 %v1258, %v1267
      %v1284 = vmul.f32 %v1258, %v1268
      %v1285 = vmul.f32 %v1259, %v1269
      %v1286 = vmul.f32 %v1259, %v1270
      %v1287 = vmul.f32 %v1260, %v1271
      %v1288 = vmul.f32 %v1260, %v1272
      %v1289 = vmul.f32 %v1261, %v1273
      %v1290 = vmul.f32 %v1261, %v1274
      %v1291 = vmul.f32 %v1262, %v1275
      %v1292 = vmul.f32 %v1262, %v1276
      %v1293 = vmul.f32 %v1263, %v1277
      %v1294 = vmul.f32 %v1263, %v1278
      %v1295 = vmul.f32 %v1264, %v1279
      %v1296 = vmul.f32 %v1264, %v1280
      %v1297 = vld [vmem:[%s11] sm:$0xff]
      %v1298 = vld [vmem:[%s11 + $0x8] sm:$0xff]
      %v1299 = vld [vmem:[%s11 + $0x10] sm:$0xff]
      %v1300 = vld [vmem:[%s11 + $0x18] sm:$0xff]
      %v1301 = vld [vmem:[%s11 + $0x20] sm:$0xff]
      %v1302 = vld [vmem:[%s11 + $0x28] sm:$0xff]
      %v1303 = vld [vmem:[%s11 + $0x30] sm:$0xff]
      %v1304 = vld [vmem:[%s11 + $0x38] sm:$0xff]
      %v1305 = vld [vmem:[%s11 + $0x40] sm:$0xff]
      %v1306 = vld [vmem:[%s11 + $0x48] sm:$0xff]
      %v1307 = vld [vmem:[%s11 + $0x50] sm:$0xff]
      %v1308 = vld [vmem:[%s11 + $0x58] sm:$0xff]
      %v1309 = vld [vmem:[%s11 + $0x60] sm:$0xff]
      %v1310 = vld [vmem:[%s11 + $0x68] sm:$0xff]
      %v1311 = vld [vmem:[%s11 + $0x70] sm:$0xff]
      %v1312 = vld [vmem:[%s11 + $0x78] sm:$0xff]
      %v1313 = vld [vmem:[%s11 + $0x80] sm:$0xff]
      %v1314 = vld [vmem:[%s11 + $0x88] sm:$0xff]
      %v1315 = vld [vmem:[%s11 + $0x90] sm:$0xff]
      %v1316 = vld [vmem:[%s11 + $0x98] sm:$0xff]
      %v1317 = vld [vmem:[%s11 + $0xa0] sm:$0xff]
      %v1318 = vld [vmem:[%s11 + $0xa8] sm:$0xff]
      %v1319 = vld [vmem:[%s11 + $0xb0] sm:$0xff]
      %v1320 = vld [vmem:[%s11 + $0xb8] sm:$0xff]
      %v1321 = vld [vmem:[%s11 + $0xc0] sm:$0xff]
      %v1322 = vld [vmem:[%s11 + $0xc8] sm:$0xff]
      %v1323 = vld [vmem:[%s11 + $0xd0] sm:$0xff]
      %v1324 = vld [vmem:[%s11 + $0xd8] sm:$0xff]
      %v1325 = vld [vmem:[%s11 + $0xe0] sm:$0xff]
      %v1326 = vld [vmem:[%s11 + $0xe8] sm:$0xff]
      %v1327 = vld [vmem:[%s11 + $0xf0] sm:$0xff]
      %v1328 = vld [vmem:[%s11 + $0xf8] sm:$0xff]
      %v1330 = vsel %vm846, %v1297, 0
      %v1333 = vsel %vm846, %v1298, 0
      %v1336 = vsel %vm846, %v1299, 0
      %v1339 = vsel %vm846, %v1300, 0
      %v1342 = vsel %vm846, %v1301, 0
      %v1345 = vsel %vm846, %v1302, 0
      %v1348 = vsel %vm846, %v1303, 0
      %v1351 = vsel %vm846, %v1304, 0
      %v1354 = vsel %vm846, %v1305, 0
      %v1357 = vsel %vm846, %v1306, 0
      %v1360 = vsel %vm846, %v1307, 0
      %v1363 = vsel %vm846, %v1308, 0
      %v1366 = vsel %vm846, %v1309, 0
      %v1369 = vsel %vm846, %v1310, 0
      %v1372 = vsel %vm846, %v1311, 0
      %v1375 = vsel %vm846, %v1312, 0
      %v1378 = vsel %vm846, %v1313, 0
      %v1381 = vsel %vm846, %v1314, 0
      %v1384 = vsel %vm846, %v1315, 0
      %v1387 = vsel %vm846, %v1316, 0
      %v1390 = vsel %vm846, %v1317, 0
      %v1393 = vsel %vm846, %v1318, 0
      %v1396 = vsel %vm846, %v1319, 0
      %v1399 = vsel %vm846, %v1320, 0
      %v1402 = vsel %vm846, %v1321, 0
      %v1405 = vsel %vm846, %v1322, 0
      %v1408 = vsel %vm846, %v1323, 0
      %v1411 = vsel %vm846, %v1324, 0
      %v1414 = vsel %vm846, %v1325, 0
      %v1417 = vsel %vm846, %v1326, 0
      %v1420 = vsel %vm846, %v1327, 0
      %v1423 = vsel %vm846, %v1328, 0
      %1425 = vmatpush.msra.mxu0 0.0
      %1426 = vmatpush.msra.mxu0 0.0
      %1427 = vmatpush.msra.mxu0 0.0
      %1428 = vmatpush.msra.mxu0 0.0
      %1429 = vmatpush.msra.mxu0 0.0
      %1430 = vmatpush.msra.mxu0 0.0
      %1431 = vmatpush.msra.mxu0 0.0
      %1432 = vmatpush.msra.mxu0 0.0
      %1433 = vmatpush.msra.mxu0 %v607
      %1434 = vmatpush.msra.mxu0 %v604
      %1435 = vmatpush.msra.mxu0 %v601
      %1436 = vmatpush.msra.mxu0 %v598
      %1437 = vmatpush.msra.mxu0 %v595
      %1438 = vmatpush.msra.mxu0 %v592
      %1439 = vmatpush.msra.mxu0 %v589
      %1440 = vmatpush.msra.mxu0 %v586
      %1441 = vmatmul.f32.gmra.mxu0 %v1330
      %v1442 = vpop.f32.mrf.mxu0
      %v1443 = vadd.f32 0.0, %v1442
      %1444 = vmatmul.f32.gmra.mxu0 %v1333
      %v1445 = vpop.f32.mrf.mxu0
      %v1446 = vadd.f32 0.0, %v1445
      %1447 = vmatmul.f32.gmra.mxu0 %v1336
      %v1448 = vpop.f32.mrf.mxu0
      %v1449 = vadd.f32 0.0, %v1448
      %1450 = vmatmul.f32.gmra.mxu0 %v1339
      %v1451 = vpop.f32.mrf.mxu0
      %v1452 = vadd.f32 0.0, %v1451
      %1453 = vmatmul.f32.gmra.mxu0 %v1342
      %v1454 = vpop.f32.mrf.mxu0
      %v1455 = vadd.f32 0.0, %v1454
      %1456 = vmatmul.f32.gmra.mxu0 %v1345
      %v1457 = vpop.f32.mrf.mxu0
      %v1458 = vadd.f32 0.0, %v1457
      %1459 = vmatmul.f32.gmra.mxu0 %v1348
      %v1460 = vpop.f32.mrf.mxu0
      %v1461 = vadd.f32 0.0, %v1460
      %1462 = vmatmul.f32.gmra.mxu0 %v1351
      %v1463 = vpop.f32.mrf.mxu0
      %v1464 = vadd.f32 0.0, %v1463
      %1465 = vmatmul.f32.gmra.mxu0 %v1354
      %v1466 = vpop.f32.mrf.mxu0
      %v1467 = vadd.f32 0.0, %v1466
      %1468 = vmatmul.f32.gmra.mxu0 %v1357
      %v1469 = vpop.f32.mrf.mxu0
      %v1470 = vadd.f32 0.0, %v1469
      %1471 = vmatmul.f32.gmra.mxu0 %v1360
      %v1472 = vpop.f32.mrf.mxu0
      %v1473 = vadd.f32 0.0, %v1472
      %1474 = vmatmul.f32.gmra.mxu0 %v1363
      %v1475 = vpop.f32.mrf.mxu0
      %v1476 = vadd.f32 0.0, %v1475
      %1477 = vmatmul.f32.gmra.mxu0 %v1366
      %v1478 = vpop.f32.mrf.mxu0
      %v1479 = vadd.f32 0.0, %v1478
      %1480 = vmatmul.f32.gmra.mxu0 %v1369
      %v1481 = vpop.f32.mrf.mxu0
      %v1482 = vadd.f32 0.0, %v1481
      %1483 = vmatmul.f32.gmra.mxu0 %v1372
      %v1484 = vpop.f32.mrf.mxu0
      %v1485 = vadd.f32 0.0, %v1484
      %1486 = vmatmul.f32.gmra.mxu0 %v1375
      %v1487 = vpop.f32.mrf.mxu0
      %v1488 = vadd.f32 0.0, %v1487
      %1489 = vmatmul.f32.gmra.mxu0 %v1378
      %v1490 = vpop.f32.mrf.mxu0
      %v1491 = vadd.f32 0.0, %v1490
      %1492 = vmatmul.f32.gmra.mxu0 %v1381
      %v1493 = vpop.f32.mrf.mxu0
      %v1494 = vadd.f32 0.0, %v1493
      %1495 = vmatmul.f32.gmra.mxu0 %v1384
      %v1496 = vpop.f32.mrf.mxu0
      %v1497 = vadd.f32 0.0, %v1496
      %1498 = vmatmul.f32.gmra.mxu0 %v1387
      %v1499 = vpop.f32.mrf.mxu0
      %v1500 = vadd.f32 0.0, %v1499
      %1501 = vmatmul.f32.gmra.mxu0 %v1390
      %v1502 = vpop.f32.mrf.mxu0
      %v1503 = vadd.f32 0.0, %v1502
      %1504 = vmatmul.f32.gmra.mxu0 %v1393
      %v1505 = vpop.f32.mrf.mxu0
      %v1506 = vadd.f32 0.0, %v1505
      %1507 = vmatmul.f32.gmra.mxu0 %v1396
      %v1508 = vpop.f32.mrf.mxu0
      %v1509 = vadd.f32 0.0, %v1508
      %1510 = vmatmul.f32.gmra.mxu0 %v1399
      %v1511 = vpop.f32.mrf.mxu0
      %v1512 = vadd.f32 0.0, %v1511
      %1513 = vmatmul.f32.gmra.mxu0 %v1402
      %v1514 = vpop.f32.mrf.mxu0
      %v1515 = vadd.f32 0.0, %v1514
      %1516 = vmatmul.f32.gmra.mxu0 %v1405
      %v1517 = vpop.f32.mrf.mxu0
      %v1518 = vadd.f32 0.0, %v1517
      %1519 = vmatmul.f32.gmra.mxu0 %v1408
      %v1520 = vpop.f32.mrf.mxu0
      %v1521 = vadd.f32 0.0, %v1520
      %1522 = vmatmul.f32.gmra.mxu0 %v1411
      %v1523 = vpop.f32.mrf.mxu0
      %v1524 = vadd.f32 0.0, %v1523
      %1525 = vmatmul.f32.gmra.mxu0 %v1414
      %v1526 = vpop.f32.mrf.mxu0
      %v1527 = vadd.f32 0.0, %v1526
      %1528 = vmatmul.f32.gmra.mxu0 %v1417
      %v1529 = vpop.f32.mrf.mxu0
      %v1530 = vadd.f32 0.0, %v1529
      %1531 = vmatmul.f32.gmra.mxu0 %v1420
      %v1532 = vpop.f32.mrf.mxu0
      %v1533 = vadd.f32 0.0, %v1532
      %1534 = vmatmul.f32.gmra.mxu0 %v1423
      %v1535 = vpop.f32.mrf.mxu0
      %v1536 = vadd.f32 0.0, %v1535
      %1537 = vdwg.mxu0
      %v1538 = vld [vmem:[%s12] sm:$0xff]
      %v1539 = vld [vmem:[%s12 + $0x8] sm:$0xff]
      %v1540 = vld [vmem:[%s12 + $0x10] sm:$0xff]
      %v1541 = vld [vmem:[%s12 + $0x18] sm:$0xff]
      %v1542 = vld [vmem:[%s12 + $0x20] sm:$0xff]
      %v1543 = vld [vmem:[%s12 + $0x28] sm:$0xff]
      %v1544 = vld [vmem:[%s12 + $0x30] sm:$0xff]
      %v1545 = vld [vmem:[%s12 + $0x38] sm:$0xff]
      %v1546 = vld [vmem:[%s12 + $0x40] sm:$0xff]
      %v1547 = vld [vmem:[%s12 + $0x48] sm:$0xff]
      %v1548 = vld [vmem:[%s12 + $0x50] sm:$0xff]
      %v1549 = vld [vmem:[%s12 + $0x58] sm:$0xff]
      %v1550 = vld [vmem:[%s12 + $0x60] sm:$0xff]
      %v1551 = vld [vmem:[%s12 + $0x68] sm:$0xff]
      %v1552 = vld [vmem:[%s12 + $0x70] sm:$0xff]
      %v1553 = vld [vmem:[%s12 + $0x78] sm:$0xff]
      %v1554 = vld [vmem:[%s12 + $0x80] sm:$0xff]
      %v1555 = vld [vmem:[%s12 + $0x88] sm:$0xff]
      %v1556 = vld [vmem:[%s12 + $0x90] sm:$0xff]
      %v1557 = vld [vmem:[%s12 + $0x98] sm:$0xff]
      %v1558 = vld [vmem:[%s12 + $0xa0] sm:$0xff]
      %v1559 = vld [vmem:[%s12 + $0xa8] sm:$0xff]
      %v1560 = vld [vmem:[%s12 + $0xb0] sm:$0xff]
      %v1561 = vld [vmem:[%s12 + $0xb8] sm:$0xff]
      %v1562 = vld [vmem:[%s12 + $0xc0] sm:$0xff]
      %v1563 = vld [vmem:[%s12 + $0xc8] sm:$0xff]
      %v1564 = vld [vmem:[%s12 + $0xd0] sm:$0xff]
      %v1565 = vld [vmem:[%s12 + $0xd8] sm:$0xff]
      %v1566 = vld [vmem:[%s12 + $0xe0] sm:$0xff]
      %v1567 = vld [vmem:[%s12 + $0xe8] sm:$0xff]
      %v1568 = vld [vmem:[%s12 + $0xf0] sm:$0xff]
      %v1569 = vld [vmem:[%s12 + $0xf8] sm:$0xff]
      %v1570 = vmul.f32 %v1443, %v1538
      %v1571 = vmul.f32 %v1446, %v1539
      %v1572 = vmul.f32 %v1449, %v1540
      %v1573 = vmul.f32 %v1452, %v1541
      %v1574 = vmul.f32 %v1455, %v1542
      %v1575 = vmul.f32 %v1458, %v1543
      %v1576 = vmul.f32 %v1461, %v1544
      %v1577 = vmul.f32 %v1464, %v1545
      %v1578 = vmul.f32 %v1467, %v1546
      %v1579 = vmul.f32 %v1470, %v1547
      %v1580 = vmul.f32 %v1473, %v1548
      %v1581 = vmul.f32 %v1476, %v1549
      %v1582 = vmul.f32 %v1479, %v1550
      %v1583 = vmul.f32 %v1482, %v1551
      %v1584 = vmul.f32 %v1485, %v1552
      %v1585 = vmul.f32 %v1488, %v1553
      %v1586 = vmul.f32 %v1491, %v1554
      %v1587 = vmul.f32 %v1494, %v1555
      %v1588 = vmul.f32 %v1497, %v1556
      %v1589 = vmul.f32 %v1500, %v1557
      %v1590 = vmul.f32 %v1503, %v1558
      %v1591 = vmul.f32 %v1506, %v1559
      %v1592 = vmul.f32 %v1509, %v1560
      %v1593 = vmul.f32 %v1512, %v1561
      %v1594 = vmul.f32 %v1515, %v1562
      %v1595 = vmul.f32 %v1518, %v1563
      %v1596 = vmul.f32 %v1521, %v1564
      %v1597 = vmul.f32 %v1524, %v1565
      %v1598 = vmul.f32 %v1527, %v1566
      %v1599 = vmul.f32 %v1530, %v1567
      %v1600 = vmul.f32 %v1533, %v1568
      %v1601 = vmul.f32 %v1536, %v1569
      %1602 = vmatpush.msra.mxu0 %v1585
      %1603 = vmatpush.msra.mxu0 %v1584
      %1604 = vmatpush.msra.mxu0 %v1583
      %1605 = vmatpush.msra.mxu0 %v1582
      %1606 = vmatpush.msra.mxu0 %v1581
      %1607 = vmatpush.msra.mxu0 %v1580
      %1608 = vmatpush.msra.mxu0 %v1579
      %1609 = vmatpush.msra.mxu0 %v1578
      %1610 = vmatpush.msra.mxu0 %v1577
      %1611 = vmatpush.msra.mxu0 %v1576
      %1612 = vmatpush.msra.mxu0 %v1575
      %1613 = vmatpush.msra.mxu0 %v1574
      %1614 = vmatpush.msra.mxu0 %v1573
      %1615 = vmatpush.msra.mxu0 %v1572
      %1616 = vmatpush.msra.mxu0 %v1571
      %1617 = vmatpush.msra.mxu0 %v1570
      %1618 = vmatmul.f32.gmra.mxu0 %v1281
      %v1619 = vpop.f32.mrf.mxu0
      %v1620 = vadd.f32 0.0, %v1619
      %1621 = vmatmul.f32.gmra.mxu0 %v1283
      %v1622 = vpop.f32.mrf.mxu0
      %v1623 = vadd.f32 0.0, %v1622
      %1624 = vmatmul.f32.gmra.mxu0 %v1285
      %v1625 = vpop.f32.mrf.mxu0
      %v1626 = vadd.f32 0.0, %v1625
      %1627 = vmatmul.f32.gmra.mxu0 %v1287
      %v1628 = vpop.f32.mrf.mxu0
      %v1629 = vadd.f32 0.0, %v1628
      %1630 = vmatmul.f32.gmra.mxu0 %v1289
      %v1631 = vpop.f32.mrf.mxu0
      %v1632 = vadd.f32 0.0, %v1631
      %1633 = vmatmul.f32.gmra.mxu0 %v1291
      %v1634 = vpop.f32.mrf.mxu0
      %v1635 = vadd.f32 0.0, %v1634
      %1636 = vmatmul.f32.gmra.mxu0 %v1293
      %v1637 = vpop.f32.mrf.mxu0
      %v1638 = vadd.f32 0.0, %v1637
      %1639 = vmatmul.f32.gmra.mxu0 %v1295
      %v1640 = vpop.f32.mrf.mxu0
      %v1641 = vadd.f32 0.0, %v1640
      %1642 = vdwg.mxu0
      %1643 = vmatpush.msra.mxu0 %v1601
      %1644 = vmatpush.msra.mxu0 %v1600
      %1645 = vmatpush.msra.mxu0 %v1599
      %1646 = vmatpush.msra.mxu0 %v1598
      %1647 = vmatpush.msra.mxu0 %v1597
      %1648 = vmatpush.msra.mxu0 %v1596
      %1649 = vmatpush.msra.mxu0 %v1595
      %1650 = vmatpush.msra.mxu0 %v1594
      %1651 = vmatpush.msra.mxu0 %v1593
      %1652 = vmatpush.msra.mxu0 %v1592
      %1653 = vmatpush.msra.mxu0 %v1591
      %1654 = vmatpush.msra.mxu0 %v1590
      %1655 = vmatpush.msra.mxu0 %v1589
      %1656 = vmatpush.msra.mxu0 %v1588
      %1657 = vmatpush.msra.mxu0 %v1587
      %1658 = vmatpush.msra.mxu0 %v1586
      %1659 = vmatmul.f32.gmra.mxu0 %v1282
      %v1660 = vpop.f32.mrf.mxu0
      %v1661 = vadd.f32 %v1620, %v1660
      %1662 = vmatmul.f32.gmra.mxu0 %v1284
      %v1663 = vpop.f32.mrf.mxu0
      %v1664 = vadd.f32 %v1623, %v1663
      %1665 = vmatmul.f32.gmra.mxu0 %v1286
      %v1666 = vpop.f32.mrf.mxu0
      %v1667 = vadd.f32 %v1626, %v1666
      %1668 = vmatmul.f32.gmra.mxu0 %v1288
      %v1669 = vpop.f32.mrf.mxu0
      %v1670 = vadd.f32 %v1629, %v1669
      %1671 = vmatmul.f32.gmra.mxu0 %v1290
      %v1672 = vpop.f32.mrf.mxu0
      %v1673 = vadd.f32 %v1632, %v1672
      %1674 = vmatmul.f32.gmra.mxu0 %v1292
      %v1675 = vpop.f32.mrf.mxu0
      %v1676 = vadd.f32 %v1635, %v1675
      %1677 = vmatmul.f32.gmra.mxu0 %v1294
      %v1678 = vpop.f32.mrf.mxu0
      %v1679 = vadd.f32 %v1638, %v1678
      %1680 = vmatmul.f32.gmra.mxu0 %v1296
      %v1681 = vpop.f32.mrf.mxu0
      %v1682 = vadd.f32 %v1641, %v1681
      %1683 = vdwg.mxu0
      %1684 = vmatpush.msra.mxu0 0.0
      %1685 = vmatpush.msra.mxu0 0.0
      %1686 = vmatpush.msra.mxu0 0.0
      %1687 = vmatpush.msra.mxu0 0.0
      %1688 = vmatpush.msra.mxu0 0.0
      %1689 = vmatpush.msra.mxu0 0.0
      %1690 = vmatpush.msra.mxu0 0.0
      %1691 = vmatpush.msra.mxu0 0.0
      %1692 = vmatpush.msra.mxu0 %v1682
      %1693 = vmatpush.msra.mxu0 %v1679
      %1694 = vmatpush.msra.mxu0 %v1676
      %1695 = vmatpush.msra.mxu0 %v1673
      %1696 = vmatpush.msra.mxu0 %v1670
      %1697 = vmatpush.msra.mxu0 %v1667
      %1698 = vmatpush.msra.mxu0 %v1664
      %1699 = vmatpush.msra.mxu0 %v1661
      %1700 = vmatmul.f32.gmra.mxu0 %v848
      %v1701 = vpop.f32.mrf.mxu0
      %v1702 = vadd.f32 0.0, %v1701
      %1703 = vmatmul.f32.gmra.mxu0 %v851
      %v1704 = vpop.f32.mrf.mxu0
      %v1705 = vadd.f32 0.0, %v1704
      %1706 = vmatmul.f32.gmra.mxu0 %v854
      %v1707 = vpop.f32.mrf.mxu0
      %v1708 = vadd.f32 0.0, %v1707
      %1709 = vmatmul.f32.gmra.mxu0 %v857
      %v1710 = vpop.f32.mrf.mxu0
      %v1711 = vadd.f32 0.0, %v1710
      %1712 = vmatmul.f32.gmra.mxu0 %v860
      %v1713 = vpop.f32.mrf.mxu0
      %v1714 = vadd.f32 0.0, %v1713
      %1715 = vmatmul.f32.gmra.mxu0 %v863
      %v1716 = vpop.f32.mrf.mxu0
      %v1717 = vadd.f32 0.0, %v1716
      %1718 = vmatmul.f32.gmra.mxu0 %v866
      %v1719 = vpop.f32.mrf.mxu0
      %v1720 = vadd.f32 0.0, %v1719
      %1721 = vmatmul.f32.gmra.mxu0 %v869
      %v1722 = vpop.f32.mrf.mxu0
      %v1723 = vadd.f32 0.0, %v1722
      %1724 = vdwg.mxu0
      %v1725 = vmul.f32 %v1702, 0.0625
      %v1726 = vmul.f32 %v1705, 0.0625
      %v1727 = vmul.f32 %v1708, 0.0625
      %v1728 = vmul.f32 %v1711, 0.0625
      %v1729 = vmul.f32 %v1714, 0.0625
      %v1730 = vmul.f32 %v1717, 0.0625
      %v1731 = vmul.f32 %v1720, 0.0625
      %v1732 = vmul.f32 %v1723, 0.0625
      %v1733 = vsub.f32 %v1661, %v1725
      %v1734 = vsub.f32 %v1664, %v1726
      %v1735 = vsub.f32 %v1667, %v1727
      %v1736 = vsub.f32 %v1670, %v1728
      %v1737 = vsub.f32 %v1673, %v1729
      %v1738 = vsub.f32 %v1676, %v1730
      %v1739 = vsub.f32 %v1679, %v1731
      %v1740 = vsub.f32 %v1682, %v1732
      %v1741 = vmul.f32 %v1733, %v1733
      %v1742 = vmul.f32 %v1734, %v1734
      %v1743 = vmul.f32 %v1735, %v1735
      %v1744 = vmul.f32 %v1736, %v1736
      %v1745 = vmul.f32 %v1737, %v1737
      %v1746 = vmul.f32 %v1738, %v1738
      %v1747 = vmul.f32 %v1739, %v1739
      %v1748 = vmul.f32 %v1740, %v1740
      %1749 = vmatpush.msra.mxu0 0.0
      %1750 = vmatpush.msra.mxu0 0.0
      %1751 = vmatpush.msra.mxu0 0.0
      %1752 = vmatpush.msra.mxu0 0.0
      %1753 = vmatpush.msra.mxu0 0.0
      %1754 = vmatpush.msra.mxu0 0.0
      %1755 = vmatpush.msra.mxu0 0.0
      %1756 = vmatpush.msra.mxu0 0.0
      %1757 = vmatpush.msra.mxu0 %v1748
      %1758 = vmatpush.msra.mxu0 %v1747
      %1759 = vmatpush.msra.mxu0 %v1746
      %1760 = vmatpush.msra.mxu0 %v1745
      %1761 = vmatpush.msra.mxu0 %v1744
      %1762 = vmatpush.msra.mxu0 %v1743
      %1763 = vmatpush.msra.mxu0 %v1742
      %1764 = vmatpush.msra.mxu0 %v1741
      %1765 = vmatmul.f32.gmra.mxu0 %v848
      %v1766 = vpop.f32.mrf.mxu0
      %v1767 = vadd.f32 0.0, %v1766
      %1768 = vmatmul.f32.gmra.mxu0 %v851
      %v1769 = vpop.f32.mrf.mxu0
      %v1770 = vadd.f32 0.0, %v1769
      %1771 = vmatmul.f32.gmra.mxu0 %v854
      %v1772 = vpop.f32.mrf.mxu0
      %v1773 = vadd.f32 0.0, %v1772
      %1774 = vmatmul.f32.gmra.mxu0 %v857
      %v1775 = vpop.f32.mrf.mxu0
      %v1776 = vadd.f32 0.0, %v1775
      %1777 = vmatmul.f32.gmra.mxu0 %v860
      %v1778 = vpop.f32.mrf.mxu0
      %v1779 = vadd.f32 0.0, %v1778
      %1780 = vmatmul.f32.gmra.mxu0 %v863
      %v1781 = vpop.f32.mrf.mxu0
      %v1782 = vadd.f32 0.0, %v1781
      %1783 = vmatmul.f32.gmra.mxu0 %v866
      %v1784 = vpop.f32.mrf.mxu0
      %v1785 = vadd.f32 0.0, %v1784
      %1786 = vmatmul.f32.gmra.mxu0 %v869
      %v1787 = vpop.f32.mrf.mxu0
      %v1788 = vadd.f32 0.0, %v1787
      %1789 = vdwg.mxu0
      %v1790 = vmul.f32 %v1767, 0.0625
      %v1791 = vmul.f32 %v1770, 0.0625
      %v1792 = vmul.f32 %v1773, 0.0625
      %v1793 = vmul.f32 %v1776, 0.0625
      %v1794 = vmul.f32 %v1779, 0.0625
      %v1795 = vmul.f32 %v1782, 0.0625
      %v1796 = vmul.f32 %v1785, 0.0625
      %v1797 = vmul.f32 %v1788, 0.0625
      %v1798 = vadd.f32 %v1790, 1e-05
      %v1799 = vadd.f32 %v1791, 1e-05
      %v1800 = vadd.f32 %v1792, 1e-05
      %v1801 = vadd.f32 %v1793, 1e-05
      %v1802 = vadd.f32 %v1794, 1e-05
      %v1803 = vadd.f32 %v1795, 1e-05
      %v1804 = vadd.f32 %v1796, 1e-05
      %v1805 = vadd.f32 %v1797, 1e-05
      %v1806 = vrsqrt.pop %v1798
      %v1807 = vmul.f32 %v1806, %v1798
      %v1808 = vmul.f32 %v1807, %v1806
      %v1809 = vmul.f32 0.5, %v1808
      %v1810 = vsub.f32 1.5, %v1809
      %v1811 = vmul.f32 %v1806, %v1810
      %vm1812 = vweird.f32 %v1798
      %vm1813 = vweird.f32 %v1806
      %vm1814 = vmor %vm1812, %vm1813
      %v1815 = vsel %vm1814, %v1806, %v1811
      %v1816 = vrsqrt.pop %v1799
      %v1817 = vmul.f32 %v1816, %v1799
      %v1818 = vmul.f32 %v1817, %v1816
      %v1819 = vmul.f32 0.5, %v1818
      %v1820 = vsub.f32 1.5, %v1819
      %v1821 = vmul.f32 %v1816, %v1820
      %vm1822 = vweird.f32 %v1799
      %vm1823 = vweird.f32 %v1816
      %vm1824 = vmor %vm1822, %vm1823
      %v1825 = vsel %vm1824, %v1816, %v1821
      %v1826 = vrsqrt.pop %v1800
      %v1827 = vmul.f32 %v1826, %v1800
      %v1828 = vmul.f32 %v1827, %v1826
      %v1829 = vmul.f32 0.5, %v1828
      %v1830 = vsub.f32 1.5, %v1829
      %v1831 = vmul.f32 %v1826, %v1830
      %vm1832 = vweird.f32 %v1800
      %vm1833 = vweird.f32 %v1826
      %vm1834 = vmor %vm1832, %vm1833
      %v1835 = vsel %vm1834, %v1826, %v1831
      %v1836 = vrsqrt.pop %v1801
      %v1837 = vmul.f32 %v1836, %v1801
      %v1838 = vmul.f32 %v1837, %v1836
      %v1839 = vmul.f32 0.5, %v1838
      %v1840 = vsub.f32 1.5, %v1839
      %v1841 = vmul.f32 %v1836, %v1840
      %vm1842 = vweird.f32 %v1801
      %vm1843 = vweird.f32 %v1836
      %vm1844 = vmor %vm1842, %vm1843
      %v1845 = vsel %vm1844, %v1836, %v1841
      %v1846 = vrsqrt.pop %v1802
      %v1847 = vmul.f32 %v1846, %v1802
      %v1848 = vmul.f32 %v1847, %v1846
      %v1849 = vmul.f32 0.5, %v1848
      %v1850 = vsub.f32 1.5, %v1849
      %v1851 = vmul.f32 %v1846, %v1850
      %vm1852 = vweird.f32 %v1802
      %vm1853 = vweird.f32 %v1846
      %vm1854 = vmor %vm1852, %vm1853
      %v1855 = vsel %vm1854, %v1846, %v1851
      %v1856 = vrsqrt.pop %v1803
      %v1857 = vmul.f32 %v1856, %v1803
      %v1858 = vmul.f32 %v1857, %v1856
      %v1859 = vmul.f32 0.5, %v1858
      %v1860 = vsub.f32 1.5, %v1859
      %v1861 = vmul.f32 %v1856, %v1860
      %vm1862 = vweird.f32 %v1803
      %vm1863 = vweird.f32 %v1856
      %vm1864 = vmor %vm1862, %vm1863
      %v1865 = vsel %vm1864, %v1856, %v1861
      %v1866 = vrsqrt.pop %v1804
      %v1867 = vmul.f32 %v1866, %v1804
      %v1868 = vmul.f32 %v1867, %v1866
      %v1869 = vmul.f32 0.5, %v1868
      %v1870 = vsub.f32 1.5, %v1869
      %v1871 = vmul.f32 %v1866, %v1870
      %vm1872 = vweird.f32 %v1804
      %vm1873 = vweird.f32 %v1866
      %vm1874 = vmor %vm1872, %vm1873
      %v1875 = vsel %vm1874, %v1866, %v1871
      %v1876 = vrsqrt.pop %v1805
      %v1877 = vmul.f32 %v1876, %v1805
      %v1878 = vmul.f32 %v1877, %v1876
      %v1879 = vmul.f32 0.5, %v1878
      %v1880 = vsub.f32 1.5, %v1879
      %v1881 = vmul.f32 %v1876, %v1880
      %vm1882 = vweird.f32 %v1805
      %vm1883 = vweird.f32 %v1876
      %vm1884 = vmor %vm1882, %vm1883
      %v1885 = vsel %vm1884, %v1876, %v1881
      %v1886 = vmul.f32 %v1733, %v1815
      %v1887 = vmul.f32 %v1734, %v1825
      %v1888 = vmul.f32 %v1735, %v1835
      %v1889 = vmul.f32 %v1736, %v1845
      %v1890 = vmul.f32 %v1737, %v1855
      %v1891 = vmul.f32 %v1738, %v1865
      %v1892 = vmul.f32 %v1739, %v1875
      %v1893 = vmul.f32 %v1740, %v1885
      %v1894 = vld [vmem:[%s13] sm:$0x1]
      %v1895 = vperm.slane %v1894, 0
      %v1896 = vmul.f32 %v1886, %v1895
      %v1897 = vmul.f32 %v1887, %v1895
      %v1898 = vmul.f32 %v1888, %v1895
      %v1899 = vmul.f32 %v1889, %v1895
      %v1900 = vmul.f32 %v1890, %v1895
      %v1901 = vmul.f32 %v1891, %v1895
      %v1902 = vmul.f32 %v1892, %v1895
      %v1903 = vmul.f32 %v1893, %v1895
      %v1904 = vld [vmem:[%s13 + $0x1] sm:$0x1]
      %v1905 = vperm.slane %v1904, 0
      %v1906 = vadd.f32 %v1896, %v1905
      %v1907 = vadd.f32 %v1897, %v1905
      %v1908 = vadd.f32 %v1898, %v1905
      %v1909 = vadd.f32 %v1899, %v1905
      %v1910 = vadd.f32 %v1900, %v1905
      %v1911 = vadd.f32 %v1901, %v1905
      %v1912 = vadd.f32 %v1902, %v1905
      %v1913 = vadd.f32 %v1903, %v1905
      %v1914 = vadd.f32 %v515, %v1906
      %v1915 = vadd.f32 %v516, %v1907
      %v1916 = vadd.f32 %v517, %v1908
      %v1917 = vadd.f32 %v518, %v1909
      %v1918 = vadd.f32 %v519, %v1910
      %v1919 = vadd.f32 %v520, %v1911
      %v1920 = vadd.f32 %v521, %v1912
      %v1921 = vadd.f32 %v522, %v1913
      %vm1922 = vcmp.gt.f32.partialorder %v1914, 0.0
      %vm1923 = vcmp.gt.f32.partialorder %v1915, 0.0
      %vm1924 = vcmp.gt.f32.partialorder %v1916, 0.0
      %vm1925 = vcmp.gt.f32.partialorder %v1917, 0.0
      %vm1926 = vcmp.gt.f32.partialorder %v1918, 0.0
      %vm1927 = vcmp.gt.f32.partialorder %v1919, 0.0
      %vm1928 = vcmp.gt.f32.partialorder %v1920, 0.0
      %vm1929 = vcmp.gt.f32.partialorder %v1921, 0.0
      %v1930 = vmin.f32 %v1914, 0.0
      %v1931 = vmin.f32 %v1915, 0.0
      %v1932 = vmin.f32 %v1916, 0.0
      %v1933 = vmin.f32 %v1917, 0.0
      %v1934 = vmin.f32 %v1918, 0.0
      %v1935 = vmin.f32 %v1919, 0.0
      %v1936 = vmin.f32 %v1920, 0.0
      %v1937 = vmin.f32 %v1921, 0.0
      %v1938 = vmul.f32 %v1930, 1.442695
      %v1939 = vpow.pop %v1938
      %v1940 = vmul.f32 %v1931, 1.442695
      %v1941 = vpow.pop %v1940
      %v1942 = vmul.f32 %v1932, 1.442695
      %v1943 = vpow.pop %v1942
      %v1944 = vmul.f32 %v1933, 1.442695
      %v1945 = vpow.pop %v1944
      %v1946 = vmul.f32 %v1934, 1.442695
      %v1947 = vpow.pop %v1946
      %v1948 = vmul.f32 %v1935, 1.442695
      %v1949 = vpow.pop %v1948
      %v1950 = vmul.f32 %v1936, 1.442695
      %v1951 = vpow.pop %v1950
      %v1952 = vmul.f32 %v1937, 1.442695
      %v1953 = vpow.pop %v1952
      %v1954 = vsub.f32 %v1939, 1.0
      %v1955 = vsub.f32 %v1941, 1.0
      %v1956 = vsub.f32 %v1943, 1.0
      %v1957 = vsub.f32 %v1945, 1.0
      %v1958 = vsub.f32 %v1947, 1.0
      %v1959 = vsub.f32 %v1949, 1.0
      %v1960 = vsub.f32 %v1951, 1.0
      %v1961 = vsub.f32 %v1953, 1.0
      %v1962 = vsel %vm1922, %v1914, %v1954
      %v1963 = vsel %vm1923, %v1915, %v1955
      %v1964 = vsel %vm1924, %v1916, %v1956
      %v1965 = vsel %vm1925, %v1917, %v1957
      %v1966 = vsel %vm1926, %v1918, %v1958
      %v1967 = vsel %vm1927, %v1919, %v1959
      %v1968 = vsel %vm1928, %v1920, %v1960
      %v1969 = vsel %vm1929, %v1921, %v1961
      %1970 = vst.msk [vmem:[%s513] sm:$0xff] %vm543, %v1962
      %1971 = vst.msk [vmem:[%s513 + $0x8] sm:$0xff] %vm543, %v1963
      %1972 = vst.msk [vmem:[%s513 + $0x10] sm:$0xff] %vm543, %v1964
      %1973 = vst.msk [vmem:[%s513 + $0x18] sm:$0xff] %vm543, %v1965
      %1974 = vst.msk [vmem:[%s513 + $0x20] sm:$0xff] %vm543, %v1966
      %1975 = vst.msk [vmem:[%s513 + $0x28] sm:$0xff] %vm543, %v1967
      %1976 = vst.msk [vmem:[%s513 + $0x30] sm:$0xff] %vm543, %v1968
      %1977 = vst.msk [vmem:[%s513 + $0x38] sm:$0xff] %vm543, %v1969
      %s1978 = smul.u32 8, %s25
      %p1979 = scmp.lt.s32.totalorder %s1978, 15
      %s1980 = scalar_select %p1979, %s1978, 15
      %s1981 = smul.addr %s1980, 8
      %s1982 = scalar_lea.vmem %s14, %s1981
      // Predicated region
      $region77: #{tpu_custom_call.1} parent=75 // pred_check
        %p1983 = pneg %p352
      $region78: #{tpu_custom_call.1} parent=75 // pred_check_branch
        %1985 = sbr.rel (%p1983) target = $region80
      $region79: #{tpu_custom_call.1} parent=75 // pred_region
        %s1986 = smul.u32 8, %s25
      $region80: #{tpu_custom_call.1} parent=75 // pred_fallthru
        _
    $region76: #{tpu_custom_call.1} parent=5 // pred_fallthru
      _
    %p1987 = scmp.le.s32.totalorder 2, %s20
    // Predicated region
    $region81: #{tpu_custom_call.1} parent=5 // pred_check
      %p1988 = pneg %p1987
    $region82: #{tpu_custom_call.1} parent=5 // pred_check_branch
      %1990 = sbr.rel (%p1988) target = $region84
    $region83: #{tpu_custom_call.1} parent=5 // pred_region
      %s1991 = ssub.s32 %s20, 2
      // Predicated region
      $region85: #{tpu_custom_call.1} parent=83 // pred_check
        %p1992 = pneg %p358
      $region86: #{tpu_custom_call.1} parent=83 // pred_check_branch
        %1994 = sbr.rel (%p1992) target = $region88
      $region87: #{tpu_custom_call.1} parent=83 // pred_region
        %s1995 = smul.u32 8, %s26
        %p1996 = scmp.lt.s32.totalorder %s1995, 15
        %s1997 = scalar_select %p1996, %s1995, 15
        %s1998 = smul.addr %s1997, 8
        %s1999 = scalar_lea.vmem %s14, %s1998
      $region88: #{tpu_custom_call.1} parent=83 // pred_fallthru
        _
    $region84: #{tpu_custom_call.1} parent=5 // pred_fallthru
      _
  $region6: #{tpu_custom_call.1} parent=0 // loop_footer
    %s24 = sadd.s32 1, %s20
  $region7: #{tpu_custom_call.1} parent=0 // loop_footer_branch
    %19 = sbr.rel target = $region3
  $region8: #{tpu_custom_call.1} parent=0 // loop_exit
    _

</llo_original>
